<compile_context>
chip_gen: v7x
topology: tpu7x:2x2x1
jax: 0.10.0
libtpu: 0.0.40
codegen_flags: <defaults>
</compile_context>

<pallas_src>
import functools

import jax
import jax.numpy as jnp
from jax.experimental import pallas as pl
from jax.experimental.pallas import tpu as pltpu


def _round_up(x, m):
    return (x + m - 1) // m * m


# --------------------------------------------------------------------------- #
# Kernel
# --------------------------------------------------------------------------- #
def _moe_kernel(sched_ref, valid_ref, x_ref, wg_ref, wu_ref, w2_ref, comb_ref,
                o_ref, acc_ref, *, n_e_grid):
    """grid = (token_tile t, active-expert slot j, intermediate_tile it)."""
    t = pl.program_id(0)
    j = pl.program_id(1)
    it = pl.program_id(2)
    n_j = pl.num_programs(1)
    n_i = pl.num_programs(2)

    # Init the resident f32 accumulator at the start of every token tile.
    @pl.when((j == 0) & (it == 0))
    def _():
        acc_ref[...] = jnp.zeros_like(acc_ref)

    # Slots past the tile's active-expert count carry no work (their weight
    # DMA is already skipped by the frozen index_maps); skip the MXU work too.
    @pl.when(valid_ref[t * n_e_grid + j] > 0)
    def _():
        x = x_ref[...]                                        # [TM, H]  bf16
        gate = jnp.dot(x, wg_ref[...], preferred_element_type=jnp.float32)
        up = jnp.dot(x, wu_ref[...], preferred_element_type=jnp.float32)
        act = gate * jax.nn.sigmoid(gate) * up                # SiLU(gate)*up f32
        act = act * comb_ref[...]                             # fold combine [TM,1]
        # Down-proj partial over this I tile accumulates directly into the
        # scratch (MRB in-place accumulate on v7x, no extra (TM,H) VPU pass).
        acc_ref[...] += jnp.dot(act.astype(w2_ref.dtype), w2_ref[...],
                                preferred_element_type=jnp.float32)

    # Write the output block once, at the last (slot, I-tile) step.
    @pl.when((j == n_j - 1) & (it == n_i - 1))
    def _():
        o_ref[...] = acc_ref[...].astype(o_ref.dtype)


# --------------------------------------------------------------------------- #
# Pallas wrapper
# --------------------------------------------------------------------------- #
def fused_moe_pallas(x, w_gate, w_up, w2, combine, sched, valid, *,
                     tm, ti, n_e_grid, up_block_offset, out_dtype,
                     vmem_limit_bytes):
    """x: [Tp, H] bf16; w_gate/w_up: packed [E, H, 2I] (same buffer) or split
    [E, H, I]; w2: [E, I, H]; combine: [E, Tp, 1] f32;
    sched/valid: [n_t * n_e_grid] int32 (SMEM prefetch)  ->  [Tp, H]."""
    Tp, H = x.shape
    E, I, _ = w2.shape
    n_t = Tp // tm
    n_i = I // ti

    kernel = functools.partial(_moe_kernel, n_e_grid=n_e_grid)

    def _expert(t, j, sched_ref):
        return sched_ref[t * n_e_grid + j]

    def _it_eff(t, j, it, valid_ref):
        # For inactive slots freeze the I-tile index at the previous step's
        # value so the block index is unchanged and no new DMA is issued.
        v = valid_ref[t * n_e_grid + j]
        return it * v + (n_i - 1) * (1 - v)

    gate_map = lambda t, j, it, s, v: (_expert(t, j, s), 0,
                                       _it_eff(t, j, it, v))
    up_map = lambda t, j, it, s, v: (_expert(t, j, s), 0,
                                     up_block_offset + _it_eff(t, j, it, v))
    w2_map = lambda t, j, it, s, v: (_expert(t, j, s),
                                     _it_eff(t, j, it, v), 0)
    comb_map = lambda t, j, it, s, v: (_expert(t, j, s), t, 0)

    return pl.pallas_call(
        kernel,
        out_shape=jax.ShapeDtypeStruct((Tp, H), out_dtype),
        grid_spec=pltpu.PrefetchScalarGridSpec(
            num_scalar_prefetch=2,                 # sched + valid -> SMEM
            grid=(n_t, n_e_grid, n_i),
            in_specs=[
                # x token tile, reused across expert slots and I tiles.
                pl.BlockSpec((tm, H), lambda t, j, it, s, v: (t, 0)),
                # gate (w1) tile, streamed per (active expert, I tile).
                pl.BlockSpec((None, H, ti), gate_map),
                # up (w3) tile (sliced from the same packed w13 buffer).
                pl.BlockSpec((None, H, ti), up_map),
                # down (w2) tile.
                pl.BlockSpec((None, ti, H), w2_map),
                # dense combine weight for (active expert, token tile).
                pl.BlockSpec((None, tm, 1), comb_map),
            ],
            out_specs=pl.BlockSpec((tm, H), lambda t, j, it, s, v: (t, 0)),
            scratch_shapes=[pltpu.VMEM((tm, H), jnp.float32)],
        ),
        compiler_params=pltpu.CompilerParams(
            # Token axis may shard across TensorCores (v7x megacore); the
            # expert-slot / I axes are sequential reductions into the scratch.
            dimension_semantics=("parallel", "arbitrary", "arbitrary"),
            vmem_limit_bytes=vmem_limit_bytes,
        ),
    )(sched, valid, x, w_gate, w_up, w2, combine)


# --------------------------------------------------------------------------- #
# Routing + tile sizing + glue
# --------------------------------------------------------------------------- #
def select_experts(router_logits, top_k, renormalize=True):
    """softmax scoring + top-k + renormalize (== fused_topk in the module)."""
    scores = jax.nn.softmax(router_logits.astype(jnp.float32), axis=-1)
    topk_weights, topk_ids = jax.lax.top_k(scores, top_k)       # [T, K]
    if renormalize:
        topk_weights = topk_weights / jnp.sum(topk_weights, axis=-1,
                                              keepdims=True)
    return topk_weights, topk_ids


def prepare_moe_weights(w13, w2, compute_dtype=jnp.bfloat16):
    """One-time (load-time) weight prep, mirroring the module's transpose-at-
    init: only a dtype cast. Gate/up tiles are sliced from the packed
    [E, H, 2I] w13 inside the kernel, so no per-call copies are made."""
    return w13.astype(compute_dtype), w2.astype(compute_dtype)


def _pick_config(T, H, I, out_bytes):
    """Generation-aware (tm, ti, vmem_limit) from the VMEM capacity."""
    try:
        cap = int(pltpu.get_tpu_info().vmem_capacity_bytes)
    except Exception:
        cap = 64 * 1024 * 1024          # conservative fallback (v7x-sized)
    budget = min(cap * 3 // 4, 100 * 1024 * 1024)   # 48 MiB v7x, 96 MiB v5e/v6e

    # Intermediate (I) tile: 256 keeps the MXU fed on every generation and
    # leaves VMEM for tm (tm is the roofline lever; ti only amortizes per-step
    # overhead).
    if I % 256 == 0:
        ti = 256
    elif I % 128 == 0:
        ti = 128
    else:
        ti = I      # TODO(synk): non-128-aligned I falls back to full-I tiles.

    # Token (M) tile: target 256 on 64 MiB VMEM (v7x), 512 on 128 MiB
    # (v5e/v6e), clamped by what fits the budget and by the real token count.
    tm_target = 256 if budget <= 48 * 1024 * 1024 else 512
    w_bytes = 2 * 3 * H * ti * 2                       # dbl-buffered bf16 weight tiles
    per_tm = H * (2 * 2 + 2 * out_bytes + 4) + 16      # x(x2) + out(x2) + acc(f32)
    avail = budget - w_bytes - (4 << 20)
    if avail > per_tm * 128:
        tm_cap = max(128, (avail // per_tm) // 128 * 128)
    else:
        tm_cap = 128
    tm = max(16, min(tm_target, tm_cap, _round_up(T, 16)))
    return tm, ti, int(budget)


def fused_moe_forward(x, router_logits, w13, w2, top_k, renormalize=True,
                      compute_dtype=jnp.bfloat16):
    """x: [T, H], w13: [E, H, 2I] (cols 0:I = w1/gate, I:2I = w3/up),
    w2: [E, I, H]  ->  [T, H] in x.dtype."""
    T, H = x.shape
    E, _, two_I = w13.shape
    I = two_I // 2
    out_dtype = x.dtype
    out_bytes = jnp.dtype(out_dtype).itemsize

    # --- routing -------------------------------------------------------------
    topk_weights, topk_ids = select_experts(router_logits, top_k, renormalize)
    one_hot = jax.nn.one_hot(topk_ids, E, dtype=jnp.float32)        # [T, K, E]
    combine_te = jnp.einsum("tk,tke->te", topk_weights, one_hot)    # [T, E]

    # --- generation-aware tile sizing -----------------------------------------
    tm, ti, vmem_limit = _pick_config(T, H, I, out_bytes)
    t_pad = _round_up(T, tm)
    n_t = t_pad // tm
    # Max distinct experts any token tile can touch -> expert grid axis size.
    n_e_grid = min(E, tm * top_k)

    # --- operand prep (activations only; weights were prepared at load time) --
    x_p = jnp.zeros((t_pad, H), compute_dtype).at[:T].set(
        x.astype(compute_dtype))
    comb_p = jnp.zeros((t_pad, E), jnp.float32).at[:T].set(combine_te)
    combine = jnp.transpose(comb_p).reshape(E, t_pad, 1)            # [E, Tp, 1]

    # --- per-token-tile compacted active-expert schedule (drives DMA skip) ----
    used = jnp.max(comb_p.reshape(n_t, tm, E), axis=1) > 0.0        # [n_t, E]
    order = jnp.argsort(jnp.where(used, 0, 1), axis=1)              # active first
    n_act = jnp.sum(used, axis=1).astype(jnp.int32)                 # [n_t]
    slot = jnp.arange(E, dtype=jnp.int32)[None, :]
    valid = slot < n_act[:, None]                                    # [n_t, E]
    last = jnp.take_along_axis(order, jnp.maximum(n_act - 1, 0)[:, None],
                               axis=1)                               # [n_t, 1]
    sched = jnp.where(valid, order, last)          # repeat last active -> no DMA
    sched = sched[:, :n_e_grid].astype(jnp.int32).reshape(-1)
    valid = valid[:, :n_e_grid].astype(jnp.int32).reshape(-1)

    # --- gate/up views of the packed w13 --------------------------------------
    packed = (I % ti == 0) and (I % 128 == 0)
    if packed:
        w_gate_arr, w_up_arr = w13, w13            # same buffer, sliced by index_map
        up_off = I // ti
    else:
        # TODO(synk): rare fallback (non-128-aligned I) materializes the split.
        w_gate_arr, w_up_arr = w13[:, :, :I], w13[:, :, I:]
        up_off = 0

    out = fused_moe_pallas(x_p, w_gate_arr, w_up_arr, w2, combine, sched, valid,
                           tm=tm, ti=ti, n_e_grid=n_e_grid,
                           up_block_offset=up_off, out_dtype=out_dtype,
                           vmem_limit_bytes=vmem_limit)
    return out[:T]


# --------------------------------------------------------------------------- #
# Pure-JAX reference (same bf16-operand / f32-accumulate numerics)
# --------------------------------------------------------------------------- #
def _reference(x, router_logits, w13, w2, top_k, renormalize=True,
               compute_dtype=jnp.bfloat16):
    topk_weights, topk_ids = select_experts(router_logits, top_k, renormalize)
    E = w13.shape[0]
    I = w13.shape[2] // 2
    xc = x.astype(compute_dtype)
    out = jnp.zeros(x.shape, jnp.float32)
    for e in range(E):
        gate = jnp.dot(xc, w13[e, :, :I].astype(compute_dtype),
                       preferred_element_type=jnp.float32)
        up = jnp.dot(xc, w13[e, :, I:].astype(compute_dtype),
                     preferred_element_type=jnp.float32)
        w_e = jnp.sum(topk_weights * (topk_ids == e), axis=-1, keepdims=True)
        act = gate * jax.nn.sigmoid(gate) * up * w_e
        y = jnp.dot(act.astype(compute_dtype), w2[e].astype(compute_dtype),
                    preferred_element_type=jnp.float32)
        out = out + y
    return out.astype(x.dtype)


if __name__ == "__main__":
    # Small shapes consistent with the module:
    #   num_experts=8, top_k=2, hidden_size=256, intermediate_size=512, tokens=16
    T, H, I, E, K = 16, 256, 512, 8, 2

    key = jax.random.PRNGKey(0)
    kx, kl, k13, k2 = jax.random.split(key, 4)

    x = jax.random.normal(kx, (T, H), dtype=jnp.float32)
    router_logits = jax.random.normal(kl, (T, E), dtype=jnp.float32)
    # Module stores w13_weight [E, 2I, H] and w2_weight [E, H, I]; the
    # unquantized method transposes them at init to [E, H, 2I] and [E, I, H].
    w13 = jax.random.normal(k13, (E, H, 2 * I), dtype=jnp.float32) * 0.1
    w2 = jax.random.normal(k2, (E, I, H), dtype=jnp.float32) * 0.1

    # One-time (load-time) weight prep: bf16 cast only, no per-call copies.
    w13_c, w2_c = prepare_moe_weights(w13, w2)

    out = fused_moe_forward(x, router_logits, w13_c, w2_c, top_k=K,
                            renormalize=True)
    out = jax.block_until_ready(out)

    ref = _reference(x, router_logits, w13, w2, top_k=K, renormalize=True)
    assert out.shape == (T, H)
    err = jnp.max(jnp.abs(out - ref))
    assert jnp.allclose(out, ref, atol=1e-2, rtol=1e-2), f"max abs err = {err}"

    print("KERNEL_OK")
</pallas_src>

<mosaic_0001>
module attributes {stable_mosaic.version = 11 : i64} {
  func.func @_moe_kernel(%arg0: i32, %arg1: i32, %arg2: i32, %arg3: memref<8xi32, #tpu.memory_space<smem>>, %arg4: memref<8xi32, #tpu.memory_space<smem>>, %arg5: memref<16x256xbf16, #tpu.memory_space<vmem>>, %arg6: memref<1x256x256xbf16, #tpu.memory_space<vmem>>, %arg7: memref<1x256x256xbf16, #tpu.memory_space<vmem>>, %arg8: memref<1x256x256xbf16, #tpu.memory_space<vmem>>, %arg9: memref<1x16x1xf32, #tpu.memory_space<vmem>>, %arg10: memref<16x256xf32, #tpu.memory_space<vmem>>, %arg11: memref<16x256xf32, #tpu.memory_space<vmem>>) attributes {dimension_semantics = [#tpu.dimension_semantics<parallel>, #tpu.dimension_semantics<arbitrary>, #tpu.dimension_semantics<arbitrary>], iteration_bounds = array<i64: 1, 8, 2>, scalar_prefetch = 2 : i64, scratch_operands = 1 : i64, tpu.core_type = #tpu.core_type<tc>, window_params = [{transform_indices = @transform_0, window_bounds = array<i64: 16, 256>}, {transform_indices = @transform_1, window_bounds = array<i64: 1, 256, 256>}, {transform_indices = @transform_2, window_bounds = array<i64: 1, 256, 256>}, {transform_indices = @transform_3, window_bounds = array<i64: 1, 256, 256>}, {transform_indices = @transform_4, window_bounds = array<i64: 1, 16, 1>}, {transform_indices = @transform_5, window_bounds = array<i64: 16, 256>}]} {
    %c0_i32 = arith.constant 0 : i32
    %0 = arith.cmpi eq, %arg1, %c0_i32 : i32
    %c0_i32_0 = arith.constant 0 : i32
    %1 = arith.cmpi eq, %arg2, %c0_i32_0 : i32
    %2 = arith.andi %0, %1 : i1
    %3 = arith.extui %2 : i1 to i32
    %c0_i32_1 = arith.constant 0 : i32
    %4 = arith.cmpi ne, %3, %c0_i32_1 : i32
    scf.if %4 {
      %cst = arith.constant 0.000000e+00 : f32
      %17 = vector.broadcast %cst : f32 to vector<16x256xf32>
      %c0 = arith.constant 0 : index
      %c0_5 = arith.constant 0 : index
      %18 = vector.load %arg11[%c0, %c0_5] : memref<16x256xf32, #tpu.memory_space<vmem>>, vector<16x256xf32>
      tpu.vector_store %arg11[%c0, %c0_5], %17 {strides = array<i32>} : memref<16x256xf32, #tpu.memory_space<vmem>>, vector<16x256xf32>,
    } else {
    }
    %c8_i32 = arith.constant 8 : i32
    %5 = arith.muli %arg0, %c8_i32 : i32
    %6 = arith.addi %5, %arg1 : i32
    %7 = arith.index_cast %6 : i32 to index
    %8 = memref.load %arg4[%7] : memref<8xi32, #tpu.memory_space<smem>>
    %c0_i32_2 = arith.constant 0 : i32
    %9 = arith.cmpi sgt, %8, %c0_i32_2 : i32
    %10 = arith.extui %9 : i1 to i32
    %c0_i32_3 = arith.constant 0 : i32
    %11 = arith.cmpi ne, %10, %c0_i32_3 : i32
    scf.if %11 {
      %c0 = arith.constant 0 : index
      %c0_5 = arith.constant 0 : index
      %17 = vector.load %arg5[%c0, %c0_5] : memref<16x256xbf16, #tpu.memory_space<vmem>>, vector<16x256xbf16>
      %c0_6 = arith.constant 0 : index
      %c0_7 = arith.constant 0 : index
      %c0_8 = arith.constant 0 : index
      %18 = vector.load %arg6[%c0_6, %c0_7, %c0_8] : memref<1x256x256xbf16, #tpu.memory_space<vmem>>, vector<1x256x256xbf16>
      %19 = vector.shape_cast %18 : vector<1x256x256xbf16> to vector<256x256xbf16>
      %cst = arith.constant dense<0.000000e+00> : vector<16x256xf32>
      %20 = tpu.matmul %17, %19, %cst {dimension_numbers = #tpu.dot_dimension_numbers<[1], [0], [0], [1], [0, 0, 1, 1], [], []>} : vector<16x256xbf16>, vector<256x256xbf16>, vector<16x256xf32> -> vector<16x256xf32>
      %c0_9 = arith.constant 0 : index
      %c0_10 = arith.constant 0 : index
      %c0_11 = arith.constant 0 : index
      %21 = vector.load %arg7[%c0_9, %c0_10, %c0_11] : memref<1x256x256xbf16, #tpu.memory_space<vmem>>, vector<1x256x256xbf16>
      %22 = vector.shape_cast %21 : vector<1x256x256xbf16> to vector<256x256xbf16>
      %cst_12 = arith.constant dense<0.000000e+00> : vector<16x256xf32>
      %23 = tpu.matmul %17, %22, %cst_12 {dimension_numbers = #tpu.dot_dimension_numbers<[1], [0], [0], [1], [0, 0, 1, 1], [], []>} : vector<16x256xbf16>, vector<256x256xbf16>, vector<16x256xf32> -> vector<16x256xf32>
      %24 = arith.negf %20 : vector<16x256xf32>
      %25 = math.exp %24 : vector<16x256xf32>
      %cst_13 = arith.constant 1.000000e+00 : f32
      %26 = vector.broadcast %cst_13 : f32 to vector<16x256xf32>
      %27 = arith.addf %26, %25 : vector<16x256xf32>
      %28 = arith.divf %26, %27 : vector<16x256xf32>
      %29 = arith.mulf %20, %28 : vector<16x256xf32>
      %30 = arith.mulf %29, %23 : vector<16x256xf32>
      %c0_14 = arith.constant 0 : index
      %c0_15 = arith.constant 0 : index
      %c0_16 = arith.constant 0 : index
      %31 = vector.load %arg9[%c0_14, %c0_15, %c0_16] : memref<1x16x1xf32, #tpu.memory_space<vmem>>, vector<1x16x1xf32>
      %32 = vector.shape_cast %31 : vector<1x16x1xf32> to vector<16x1xf32>
      %33 = vector.broadcast %32 : vector<16x1xf32> to vector<16x256xf32>
      %34 = arith.mulf %30, %33 : vector<16x256xf32>
      %c0_17 = arith.constant 0 : index
      %c0_18 = arith.constant 0 : index
      %35 = vector.load %arg11[%c0_17, %c0_18] : memref<16x256xf32, #tpu.memory_space<vmem>>, vector<16x256xf32>
      %36 = arith.truncf %34 : vector<16x256xf32> to vector<16x256xbf16>
      %c0_19 = arith.constant 0 : index
      %c0_20 = arith.constant 0 : index
      %c0_21 = arith.constant 0 : index
      %37 = vector.load %arg8[%c0_19, %c0_20, %c0_21] : memref<1x256x256xbf16, #tpu.memory_space<vmem>>, vector<1x256x256xbf16>
      %38 = vector.shape_cast %37 : vector<1x256x256xbf16> to vector<256x256xbf16>
      %cst_22 = arith.constant dense<0.000000e+00> : vector<16x256xf32>
      %39 = tpu.matmul %36, %38, %cst_22 {dimension_numbers = #tpu.dot_dimension_numbers<[1], [0], [0], [1], [0, 0, 1, 1], [], []>} : vector<16x256xbf16>, vector<256x256xbf16>, vector<16x256xf32> -> vector<16x256xf32>
      %40 = arith.addf %35, %39 : vector<16x256xf32>
      %c0_23 = arith.constant 0 : index
      %c0_24 = arith.constant 0 : index
      %41 = vector.load %arg11[%c0_23, %c0_24] : memref<16x256xf32, #tpu.memory_space<vmem>>, vector<16x256xf32>
      tpu.vector_store %arg11[%c0_23, %c0_24], %40 {strides = array<i32>} : memref<16x256xf32, #tpu.memory_space<vmem>>, vector<16x256xf32>,
    } else {
    }
    %c7_i32 = arith.constant 7 : i32
    %12 = arith.cmpi eq, %arg1, %c7_i32 : i32
    %c1_i32 = arith.constant 1 : i32
    %13 = arith.cmpi eq, %arg2, %c1_i32 : i32
    %14 = arith.andi %12, %13 : i1
    %15 = arith.extui %14 : i1 to i32
    %c0_i32_4 = arith.constant 0 : i32
    %16 = arith.cmpi ne, %15, %c0_i32_4 : i32
    scf.if %16 {
      %c0 = arith.constant 0 : index
      %c0_5 = arith.constant 0 : index
      %17 = vector.load %arg11[%c0, %c0_5] : memref<16x256xf32, #tpu.memory_space<vmem>>, vector<16x256xf32>
      %c0_6 = arith.constant 0 : index
      %c0_7 = arith.constant 0 : index
      %18 = vector.load %arg10[%c0_6, %c0_7] : memref<16x256xf32, #tpu.memory_space<vmem>>, vector<16x256xf32>
      tpu.vector_store %arg10[%c0_6, %c0_7], %17 {strides = array<i32>} : memref<16x256xf32, #tpu.memory_space<vmem>>, vector<16x256xf32>,
    } else {
    }
    return
  }
  func.func @transform_0(%arg0: i32, %arg1: i32, %arg2: i32, %arg3: memref<8xi32, #tpu.memory_space<smem>>, %arg4: memref<8xi32, #tpu.memory_space<smem>>) -> (i32, i32) {
    %c0_i32 = arith.constant 0 : i32
    %c0_i32_0 = arith.constant 0 : i32
    return %arg0, %c0_i32 : i32, i32
  }
  func.func @transform_1(%arg0: i32, %arg1: i32, %arg2: i32, %arg3: memref<8xi32, #tpu.memory_space<smem>>, %arg4: memref<8xi32, #tpu.memory_space<smem>>) -> (i32, i32, i32) {
    %c8_i32 = arith.constant 8 : i32
    %0 = arith.muli %arg0, %c8_i32 : i32
    %1 = arith.addi %0, %arg1 : i32
    %2 = arith.index_cast %1 : i32 to index
    %3 = memref.load %arg3[%2] : memref<8xi32, #tpu.memory_space<smem>>
    %c8_i32_0 = arith.constant 8 : i32
    %4 = arith.muli %arg0, %c8_i32_0 : i32
    %5 = arith.addi %4, %arg1 : i32
    %6 = arith.index_cast %5 : i32 to index
    %7 = memref.load %arg4[%6] : memref<8xi32, #tpu.memory_space<smem>>
    %8 = arith.muli %arg2, %7 : i32
    %c1_i32 = arith.constant 1 : i32
    %9 = arith.subi %c1_i32, %7 : i32
    %c1_i32_1 = arith.constant 1 : i32
    %10 = arith.muli %c1_i32_1, %9 : i32
    %11 = arith.addi %8, %10 : i32
    %c0_i32 = arith.constant 0 : i32
    %c0_i32_2 = arith.constant 0 : i32
    return %3, %c0_i32, %11 : i32, i32, i32
  }
  func.func @transform_2(%arg0: i32, %arg1: i32, %arg2: i32, %arg3: memref<8xi32, #tpu.memory_space<smem>>, %arg4: memref<8xi32, #tpu.memory_space<smem>>) -> (i32, i32, i32) {
    %c8_i32 = arith.constant 8 : i32
    %0 = arith.muli %arg0, %c8_i32 : i32
    %1 = arith.addi %0, %arg1 : i32
    %2 = arith.index_cast %1 : i32 to index
    %3 = memref.load %arg3[%2] : memref<8xi32, #tpu.memory_space<smem>>
    %c8_i32_0 = arith.constant 8 : i32
    %4 = arith.muli %arg0, %c8_i32_0 : i32
    %5 = arith.addi %4, %arg1 : i32
    %6 = arith.index_cast %5 : i32 to index
    %7 = memref.load %arg4[%6] : memref<8xi32, #tpu.memory_space<smem>>
    %8 = arith.muli %arg2, %7 : i32
    %c1_i32 = arith.constant 1 : i32
    %9 = arith.subi %c1_i32, %7 : i32
    %c1_i32_1 = arith.constant 1 : i32
    %10 = arith.muli %c1_i32_1, %9 : i32
    %11 = arith.addi %8, %10 : i32
    %c2_i32 = arith.constant 2 : i32
    %12 = arith.addi %c2_i32, %11 : i32
    %c0_i32 = arith.constant 0 : i32
    %c0_i32_2 = arith.constant 0 : i32
    return %3, %c0_i32, %12 : i32, i32, i32
  }
  func.func @transform_3(%arg0: i32, %arg1: i32, %arg2: i32, %arg3: memref<8xi32, #tpu.memory_space<smem>>, %arg4: memref<8xi32, #tpu.memory_space<smem>>) -> (i32, i32, i32) {
    %c8_i32 = arith.constant 8 : i32
    %0 = arith.muli %arg0, %c8_i32 : i32
    %1 = arith.addi %0, %arg1 : i32
    %2 = arith.index_cast %1 : i32 to index
    %3 = memref.load %arg3[%2] : memref<8xi32, #tpu.memory_space<smem>>
    %c8_i32_0 = arith.constant 8 : i32
    %4 = arith.muli %arg0, %c8_i32_0 : i32
    %5 = arith.addi %4, %arg1 : i32
    %6 = arith.index_cast %5 : i32 to index
    %7 = memref.load %arg4[%6] : memref<8xi32, #tpu.memory_space<smem>>
    %8 = arith.muli %arg2, %7 : i32
    %c1_i32 = arith.constant 1 : i32
    %9 = arith.subi %c1_i32, %7 : i32
    %c1_i32_1 = arith.constant 1 : i32
    %10 = arith.muli %c1_i32_1, %9 : i32
    %11 = arith.addi %8, %10 : i32
    %c0_i32 = arith.constant 0 : i32
    %c0_i32_2 = arith.constant 0 : i32
    return %3, %11, %c0_i32 : i32, i32, i32
  }
  func.func @transform_4(%arg0: i32, %arg1: i32, %arg2: i32, %arg3: memref<8xi32, #tpu.memory_space<smem>>, %arg4: memref<8xi32, #tpu.memory_space<smem>>) -> (i32, i32, i32) {
    %c8_i32 = arith.constant 8 : i32
    %0 = arith.muli %arg0, %c8_i32 : i32
    %1 = arith.addi %0, %arg1 : i32
    %2 = arith.index_cast %1 : i32 to index
    %3 = memref.load %arg3[%2] : memref<8xi32, #tpu.memory_space<smem>>
    %c0_i32 = arith.constant 0 : i32
    %c0_i32_0 = arith.constant 0 : i32
    return %3, %arg0, %c0_i32 : i32, i32, i32
  }
  func.func @transform_5(%arg0: i32, %arg1: i32, %arg2: i32, %arg3: memref<8xi32, #tpu.memory_space<smem>>, %arg4: memref<8xi32, #tpu.memory_space<smem>>) -> (i32, i32) {
    %c0_i32 = arith.constant 0 : i32
    %c0_i32_0 = arith.constant 0 : i32
    return %arg0, %c0_i32 : i32, i32
  }
}

</mosaic_0001>

<llo_original>
// kernel: tpu_custom_call.1
$region0: #{tpu_custom_call.1}
  #allocation0 [shape = 'u32[]', space=smem, size = 0x4, offset = 0x4, fixed_abs, tag = 'smem constant byte address 0x4 - core index']
  #allocation1 [shape = 'u32[144,128]{1,0:T(1,128)}', space=vmem, size = 0x12000, scoped, tag = 'internal scratch']
  #allocation2 [shape = 'f32[16,256]{1,0:T(8,128)}', space=vmem, size = 0x4000, scoped, tag = 'scratch operand']
  #allocation3 [shape = 's32[1]{0}', space=sflag, size = 0x4, scoped, tag = 'scoped memory for tpu_custom_call.1']
  #allocation4 [shape = 'u8[512]{0}', space=smem, size = 0x200, scoped, tag = 'prefetched SMEM operand 0']
  #allocation5 [shape = 'u8[512]{0}', space=smem, size = 0x200, scoped, tag = 'prefetched SMEM operand 1']
  %s0 = inlined_call_operand.hbm [shape: s32[8], index: 0, kind: input, shape index: {}]
  %s1 = inlined_call_operand.hbm [shape: s32[8], index: 1, kind: input, shape index: {}]
  %s2 = inlined_call_operand.hbm [shape: bf16[16,256], index: 2, kind: input, shape index: {}]
  %s3 = inlined_call_operand.hbm [shape: bf16[8,256,1024], index: 3, kind: input, shape index: {}]
  %s4 = inlined_call_operand.hbm [shape: bf16[8,256,1024], index: 4, kind: input, shape index: {}]
  %s5 = inlined_call_operand.hbm [shape: bf16[8,512,256], index: 5, kind: input, shape index: {}]
  %s6 = inlined_call_operand.vmem [shape: f32[8,16,1], index: 6, kind: input, shape index: {}]
  %s7 = inlined_call_operand.hbm [shape: f32[16,256], index: 7, kind: output, shape index: {}]
  %s8 = sld [smem:[#allocation0]]
  $region81: #{tpu_custom_call.1} parent=0
    _
  %s10 = ssub.s32 1, %s8
  %s11 = scalar_select 0, %s10, %s8
  %13 = dma.hbm_to_smem %s0, 16, [#allocation4], [#allocation3]
  %15 = dma.hbm_to_smem %s1, 16, [#allocation5], [#allocation3]
  %16 = dma.done [#allocation3], 32
  %17 = sfence
  $region1: #{tpu_custom_call.1} parent=0
    #allocation6 [shape = 'u8[8192]{0}', space=vmem, size = 0x2000, scoped, tag = 'input window, operand 2, single buffered']
    #allocation7 [shape = 's32[2]{0}', space=sflag, size = 0x8, scoped, tag = 'scoped memory for tpu_custom_call.1']
    #allocation8 [shape = 's32[2]{0}', space=sflag, size = 0x8, scoped, tag = 'scoped memory for tpu_custom_call.1']
    #allocation9 [shape = 'u8[262144]{0}', space=vmem, size = 0x40000, scoped, tag = 'input window, operand 3']
    #allocation10 [shape = 's32[2]{0}', space=sflag, size = 0x8, scoped, tag = 'scoped memory for tpu_custom_call.1']
    #allocation11 [shape = 'u8[262144]{0}', space=vmem, size = 0x40000, scoped, tag = 'input window, operand 4']
    #allocation12 [shape = 'u8[262144]{0}', space=vmem, size = 0x40000, scoped, tag = 'input window, operand 5']
    #allocation13 [shape = 's32[2]{0}', space=sflag, size = 0x8, scoped, tag = 'scoped memory for tpu_custom_call.1']
    #allocation14 [shape = 'u8[16384]{0}', space=vmem, size = 0x4000, scoped, tag = 'output window, operand 0, single buffered']
    %18 = vsyncpa [#allocation7], 0
    %19 = vsyncpa [#allocation10], 0
    %s20 = scalar_lea.sflag [#allocation10], 1
    %21 = vsyncpa %s20, 0
    %22 = vsyncpa [#allocation13], 0
    %s23 = scalar_lea.sflag [#allocation13], 1
    %24 = vsyncpa %s23, 0
    %25 = vsyncpa [#allocation8], 0
    loop: start=0, step=1, limit=18
    $region2: #{tpu_custom_call.1} parent=1 // loop_pre_header
      _
    $region3: #{tpu_custom_call.1} parent=1 // loop_header
      %s27 = sphi 0, %s31
      %p28 = scmp.ge.s32.totalorder %s27, 18
      %s34 = sphi 0, %s53
      %s35 = sphi 0, %s49
      %s36 = sphi 0, %s45
      %s37 = sphi 0, %s34
      %s38 = sphi 0, %s35
      %s39 = sphi 0, %s36
      %s40 = sphi 0, %s37
      %s41 = sphi 0, %s38
      %s42 = sphi 0, %s39
      %s56 = sphi 0, %s58
      %s59 = sphi 0, %s56
      %s60 = sphi 0, %s59
      %s76 = sphi 0, %s60
      %s98 = sphi 0, %s100
      %s101 = sphi 0, %s98
      %s102 = sphi 0, %s101
      %s118 = sphi 0, %s102
      %s142 = sphi 0, %s144
      %s145 = sphi 0, %s142
      %s146 = sphi 0, %s145
      %s162 = sphi 0, %s146
      %s184 = sphi 0, %s186
      %s187 = sphi 0, %s184
      %s188 = sphi 0, %s187
      %s204 = sphi 0, %s188
      %s218 = sphi 0, %s220
      %s221 = sphi 0, %s218
      %s222 = sphi 0, %s221
      %s238 = sphi 0, %s222
      %s244 = sphi 0, %s246
      %s247 = sphi 0, %s244
      %s248 = sphi 0, %s247
      %s264 = sphi 0, %s248
    $region4: #{tpu_custom_call.1} parent=1 // loop_header_branch
      %30 = sbr.rel (%p28) target = $region8
    $region5: #{tpu_custom_call.1} parent=1 // loop_body
      %s32 = ssub.s32 %s27, 1
      %s33 = ssub.s32 %s27, 2
      %s43 = sadd.s32 1, %s36
      %p44 = scmp.ge.s32.totalorder %s43, 2
      %s45 = scalar_select %p44, 0, %s43
      %s46 = sadd.s32 1, %s35
      %s47 = scalar_select %p44, %s46, %s35
      %p48 = scmp.ge.s32.totalorder %s47, 8
      %s49 = scalar_select %p48, 0, %s47
      %s50 = sadd.s32 1, %s34
      %s51 = scalar_select %p48, %s50, %s34
      %p52 = scmp.ge.s32.totalorder %s51, 1
      %s53 = scalar_select %p52, 0, %s51
      %s54 = ssub.s32 %s34, %s53
      %p55 = scmp.eq.s32.totalorder %s54, 0
      %s57 = sadd.s32 %s56, 1
      %s58 = scalar_select %p55, %s56, %s57
      %p61 = pneg %p55
      %p62 = scmp.eq.s32.totalorder %s27, 15
      %p63 = por %p61, %p62
      %p64 = scmp.ne.s32.totalorder %s56, %s59
      %p65 = scmp.eq.s32.totalorder %s27, 0
      %p66 = por %p64, %p65
      %p67 = scmp.ne.s32.totalorder %s56, %s59
      %p68 = scmp.eq.s32.totalorder %s32, 15
      %p69 = por %p67, %p68
      %p70 = scmp.ne.s32.totalorder %s59, %s60
      %p71 = scmp.eq.s32.totalorder %s32, 0
      %p72 = por %p70, %p71
      %p73 = scmp.ne.s32.totalorder %s59, %s60
      %p74 = scmp.eq.s32.totalorder %s33, 15
      %p75 = por %p73, %p74
      %p77 = scmp.ne.s32.totalorder %s60, %s76
      %p78 = scmp.eq.s32.totalorder %s33, 0
      %p79 = por %p77, %p78
      %s80 = smul.u32 %s34, 8
      %s81 = sadd.s32 %s80, %s35
      %s82 = sld [smem:[#allocation4 + %s81]]
      %s83 = sld [smem:[#allocation5 + %s81]]
      %s84 = smul.u32 %s36, %s83
      %s85 = ssub.s32 1, %s83
      %s86 = sadd.s32 %s84, %s85
      %s87 = smul.u32 %s53, 8
      %s88 = sadd.s32 %s87, %s49
      %s89 = sld [smem:[#allocation4 + %s88]]
      %s90 = sld [smem:[#allocation5 + %s88]]
      %s91 = smul.u32 %s45, %s90
      %s92 = ssub.s32 1, %s90
      %s93 = sadd.s32 %s91, %s92
      %s94 = ssub.s32 %s82, %s89
      %s95 = ssub.s32 %s86, %s93
      %s96 = sor.u32 %s94, %s95
      %p97 = scmp.eq.s32.totalorder %s96, 0
      %s99 = sadd.s32 %s98, 1
      %s100 = scalar_select %p97, %s98, %s99
      %p103 = pneg %p97
      %p104 = scmp.eq.s32.totalorder %s27, 15
      %p105 = por %p103, %p104
      %p106 = scmp.ne.s32.totalorder %s98, %s101
      %p107 = scmp.eq.s32.totalorder %s27, 0
      %p108 = por %p106, %p107
      %p109 = scmp.ne.s32.totalorder %s98, %s101
      %p110 = scmp.eq.s32.totalorder %s32, 15
      %p111 = por %p109, %p110
      %p112 = scmp.ne.s32.totalorder %s101, %s102
      %p113 = scmp.eq.s32.totalorder %s32, 0
      %p114 = por %p112, %p113
      %p115 = scmp.ne.s32.totalorder %s101, %s102
      %p116 = scmp.eq.s32.totalorder %s33, 15
      %p117 = por %p115, %p116
      %p119 = scmp.ne.s32.totalorder %s102, %s118
      %p120 = scmp.eq.s32.totalorder %s33, 0
      %p121 = por %p119, %p120
      %s122 = smul.u32 %s34, 8
      %s123 = sadd.s32 %s122, %s35
      %s124 = sld [smem:[#allocation4 + %s123]]
      %s125 = sld [smem:[#allocation5 + %s123]]
      %s126 = smul.u32 %s36, %s125
      %s127 = ssub.s32 1, %s125
      %s128 = sadd.s32 %s126, %s127
      %s129 = sadd.s32 %s128, 2
      %s130 = smul.u32 %s53, 8
      %s131 = sadd.s32 %s130, %s49
      %s132 = sld [smem:[#allocation4 + %s131]]
      %s133 = sld [smem:[#allocation5 + %s131]]
      %s134 = smul.u32 %s45, %s133
      %s135 = ssub.s32 1, %s133
      %s136 = sadd.s32 %s134, %s135
      %s137 = sadd.s32 %s136, 2
      %s138 = ssub.s32 %s124, %s132
      %s139 = ssub.s32 %s129, %s137
      %s140 = sor.u32 %s138, %s139
      %p141 = scmp.eq.s32.totalorder %s140, 0
      %s143 = sadd.s32 %s142, 1
      %s144 = scalar_select %p141, %s142, %s143
      %p147 = pneg %p141
      %p148 = scmp.eq.s32.totalorder %s27, 15
      %p149 = por %p147, %p148
      %p150 = scmp.ne.s32.totalorder %s142, %s145
      %p151 = scmp.eq.s32.totalorder %s27, 0
      %p152 = por %p150, %p151
      %p153 = scmp.ne.s32.totalorder %s142, %s145
      %p154 = scmp.eq.s32.totalorder %s32, 15
      %p155 = por %p153, %p154
      %p156 = scmp.ne.s32.totalorder %s145, %s146
      %p157 = scmp.eq.s32.totalorder %s32, 0
      %p158 = por %p156, %p157
      %p159 = scmp.ne.s32.totalorder %s145, %s146
      %p160 = scmp.eq.s32.totalorder %s33, 15
      %p161 = por %p159, %p160
      %p163 = scmp.ne.s32.totalorder %s146, %s162
      %p164 = scmp.eq.s32.totalorder %s33, 0
      %p165 = por %p163, %p164
      %s166 = smul.u32 %s34, 8
      %s167 = sadd.s32 %s166, %s35
      %s168 = sld [smem:[#allocation4 + %s167]]
      %s169 = sld [smem:[#allocation5 + %s167]]
      %s170 = smul.u32 %s36, %s169
      %s171 = ssub.s32 1, %s169
      %s172 = sadd.s32 %s170, %s171
      %s173 = smul.u32 %s53, 8
      %s174 = sadd.s32 %s173, %s49
      %s175 = sld [smem:[#allocation4 + %s174]]
      %s176 = sld [smem:[#allocation5 + %s174]]
      %s177 = smul.u32 %s45, %s176
      %s178 = ssub.s32 1, %s176
      %s179 = sadd.s32 %s177, %s178
      %s180 = ssub.s32 %s168, %s175
      %s181 = ssub.s32 %s172, %s179
      %s182 = sor.u32 %s180, %s181
      %p183 = scmp.eq.s32.totalorder %s182, 0
      %s185 = sadd.s32 %s184, 1
      %s186 = scalar_select %p183, %s184, %s185
      %p189 = pneg %p183
      %p190 = scmp.eq.s32.totalorder %s27, 15
      %p191 = por %p189, %p190
      %p192 = scmp.ne.s32.totalorder %s184, %s187
      %p193 = scmp.eq.s32.totalorder %s27, 0
      %p194 = por %p192, %p193
      %p195 = scmp.ne.s32.totalorder %s184, %s187
      %p196 = scmp.eq.s32.totalorder %s32, 15
      %p197 = por %p195, %p196
      %p198 = scmp.ne.s32.totalorder %s187, %s188
      %p199 = scmp.eq.s32.totalorder %s32, 0
      %p200 = por %p198, %p199
      %p201 = scmp.ne.s32.totalorder %s187, %s188
      %p202 = scmp.eq.s32.totalorder %s33, 15
      %p203 = por %p201, %p202
      %p205 = scmp.ne.s32.totalorder %s188, %s204
      %p206 = scmp.eq.s32.totalorder %s33, 0
      %p207 = por %p205, %p206
      %s208 = smul.u32 %s34, 8
      %s209 = sadd.s32 %s208, %s35
      %s210 = sld [smem:[#allocation4 + %s209]]
      %s211 = smul.u32 %s53, 8
      %s212 = sadd.s32 %s211, %s49
      %s213 = sld [smem:[#allocation4 + %s212]]
      %s214 = ssub.s32 %s210, %s213
      %s215 = ssub.s32 %s34, %s53
      %s216 = sor.u32 %s214, %s215
      %p217 = scmp.eq.s32.totalorder %s216, 0
      %s219 = sadd.s32 %s218, 1
      %s220 = scalar_select %p217, %s218, %s219
      %p223 = pneg %p217
      %p224 = scmp.eq.s32.totalorder %s27, 15
      %p225 = por %p223, %p224
      %p226 = scmp.ne.s32.totalorder %s218, %s221
      %p227 = scmp.eq.s32.totalorder %s27, 0
      %p228 = por %p226, %p227
      %p229 = scmp.ne.s32.totalorder %s218, %s221
      %p230 = scmp.eq.s32.totalorder %s32, 15
      %p231 = por %p229, %p230
      %p232 = scmp.ne.s32.totalorder %s221, %s222
      %p233 = scmp.eq.s32.totalorder %s32, 0
      %p234 = por %p232, %p233
      %p235 = scmp.ne.s32.totalorder %s221, %s222
      %p236 = scmp.eq.s32.totalorder %s33, 15
      %p237 = por %p235, %p236
      %p239 = scmp.ne.s32.totalorder %s222, %s238
      %p240 = scmp.eq.s32.totalorder %s33, 0
      %p241 = por %p239, %p240
      %s242 = ssub.s32 %s34, %s53
      %p243 = scmp.eq.s32.totalorder %s242, 0
      %s245 = sadd.s32 %s244, 1
      %s246 = scalar_select %p243, %s244, %s245
      %p249 = pneg %p243
      %p250 = scmp.eq.s32.totalorder %s27, 15
      %p251 = por %p249, %p250
      %p252 = scmp.ne.s32.totalorder %s244, %s247
      %p253 = scmp.eq.s32.totalorder %s27, 0
      %p254 = por %p252, %p253
      %p255 = scmp.ne.s32.totalorder %s244, %s247
      %p256 = scmp.eq.s32.totalorder %s32, 15
      %p257 = por %p255, %p256
      %p258 = scmp.ne.s32.totalorder %s247, %s248
      %p259 = scmp.eq.s32.totalorder %s32, 0
      %p260 = por %p258, %p259
      %p261 = scmp.ne.s32.totalorder %s247, %s248
      %p262 = scmp.eq.s32.totalorder %s33, 15
      %p263 = por %p261, %p262
      %p265 = scmp.ne.s32.totalorder %s248, %s264
      %p266 = scmp.eq.s32.totalorder %s33, 0
      %p267 = por %p265, %p266
      %p268 = scmp.le.s32.totalorder 1, %s27
      %p269 = scmp.lt.s32.totalorder %s27, 17
      %p270 = pnand %p268, %p269
      %p271 = pneg %p270
      // Predicated region
      $region9: #{tpu_custom_call.1} parent=5 // pred_check
        _
      $region10: #{tpu_custom_call.1} parent=5 // pred_check_branch
        %273 = sbr.rel (%p270) target = $region12
      $region11: #{tpu_custom_call.1} parent=5 // pred_region
        %s274 = ssub.s32 %s27, 1
        // Predicated region
        $region13: #{tpu_custom_call.1} parent=11 // pred_check
          %p275 = pneg %p72
        $region14: #{tpu_custom_call.1} parent=11 // pred_check_branch
          %277 = sbr.rel (%p275) target = $region16
        $region15: #{tpu_custom_call.1} parent=11 // pred_region
          %s278 = smul.u32 2, %s37
          %s280 = ssub.s32 256, 256
          %281 = vsyncadd [#allocation7], %s280
          %s282 = smul.addr %s278, 2
          %s283 = smul.addr %s282, 64
          %s284 = scalar_lea.hbm %s2, %s283
          %s285 = sshll.u32 [#allocation6], 4
          %s286 = int_to_ptr.vmem [resolvable:$true] %s285
          %291 = dma.hbm_to_vmem [thread:$0]  %s284, 256, %s286, [#allocation7], 128, 128, 8
        $region16: #{tpu_custom_call.1} parent=11 // pred_fallthru
          _
      $region12: #{tpu_custom_call.1} parent=5 // pred_fallthru
        _
      %p292 = scmp.lt.s32.totalorder %s27, 16
      // Predicated region
      $region17: #{tpu_custom_call.1} parent=5 // pred_check
        %p293 = pneg %p292
      $region18: #{tpu_custom_call.1} parent=5 // pred_check_branch
        %295 = sbr.rel (%p293) target = $region20
      $region19: #{tpu_custom_call.1} parent=5 // pred_region
        // Predicated region
        $region21: #{tpu_custom_call.1} parent=19 // pred_check
          %p296 = pneg %p108
        $region22: #{tpu_custom_call.1} parent=19 // pred_check_branch
          %298 = sbr.rel (%p296) target = $region24
        $region23: #{tpu_custom_call.1} parent=19 // pred_region
          %s299 = sand.u32 %s27, 1
          %s300 = scalar_lea.sflag [#allocation10], %s299
          %s301 = sand.u32 %s98, 1
          %s302 = smul.addr %s301, 256
          %s303 = scalar_lea.vmem [#allocation9], %s302
          %s304 = smul.u32 %s34, 8
          %s305 = sadd.s32 %s304, %s35
          %s306 = sld [smem:[#allocation4 + %s305]]
          %s307 = sld [smem:[#allocation5 + %s305]]
          %s308 = smul.u32 %s36, %s307
          %s309 = ssub.s32 1, %s307
          %s310 = sadd.s32 %s308, %s309
          %s311 = smul.u32 2, %s310
          %s313 = ssub.s32 4096, 4096
          %314 = vsyncadd %s300, %s313
          %s315 = smul.addr %s306, 256
          %s316 = sadd.s32 %s311, %s315
          %s317 = smul.addr %s316, 64
          %s318 = scalar_lea.hbm %s3, %s317
          %s319 = sshll.u32 %s303, 4
          %s320 = int_to_ptr.vmem [resolvable:$true] %s319
          %325 = dma.hbm_to_vmem [thread:$0]  %s318, 4096, %s320, %s300, 512, 128, 8
        $region24: #{tpu_custom_call.1} parent=19 // pred_fallthru
          _
        // Predicated region
        $region25: #{tpu_custom_call.1} parent=19 // pred_check
          %p326 = pneg %p152
        $region26: #{tpu_custom_call.1} parent=19 // pred_check_branch
          %328 = sbr.rel (%p326) target = $region28
        $region27: #{tpu_custom_call.1} parent=19 // pred_region
          %s329 = sand.u32 %s27, 1
          %s330 = scalar_lea.sflag [#allocation10], %s329
          %s331 = sand.u32 %s142, 1
          %s332 = smul.addr %s331, 256
          %s333 = scalar_lea.vmem [#allocation11], %s332
          %s334 = smul.u32 %s34, 8
          %s335 = sadd.s32 %s334, %s35
          %s336 = sld [smem:[#allocation4 + %s335]]
          %s337 = sld [smem:[#allocation5 + %s335]]
          %s338 = smul.u32 %s36, %s337
          %s339 = ssub.s32 1, %s337
          %s340 = sadd.s32 %s338, %s339
          %s341 = sadd.s32 %s340, 2
          %s342 = smul.u32 2, %s341
          %s344 = ssub.s32 4096, 4096
          %345 = vsyncadd %s330, %s344
          %s346 = smul.addr %s336, 256
          %s347 = sadd.s32 %s342, %s346
          %s348 = smul.addr %s347, 64
          %s349 = scalar_lea.hbm %s4, %s348
          %s350 = sshll.u32 %s333, 4
          %s351 = int_to_ptr.vmem [resolvable:$true] %s350
          %356 = dma.hbm_to_vmem [thread:$0]  %s349, 4096, %s351, %s330, 512, 128, 8
        $region28: #{tpu_custom_call.1} parent=19 // pred_fallthru
          _
        // Predicated region
        $region29: #{tpu_custom_call.1} parent=19 // pred_check
          %p357 = pneg %p194
        $region30: #{tpu_custom_call.1} parent=19 // pred_check_branch
          %359 = sbr.rel (%p357) target = $region32
        $region31: #{tpu_custom_call.1} parent=19 // pred_region
          %s360 = sand.u32 %s184, 1
          %s361 = scalar_lea.sflag [#allocation13], %s360
          %s362 = sand.u32 %s184, 1
          %s363 = smul.addr %s362, 256
          %s364 = scalar_lea.vmem [#allocation12], %s363
          %s365 = smul.u32 %s34, 8
          %s366 = sadd.s32 %s365, %s35
          %s367 = sld [smem:[#allocation4 + %s366]]
          %s368 = sld [smem:[#allocation5 + %s366]]
          %s369 = smul.u32 %s36, %s368
          %s370 = ssub.s32 1, %s368
          %s371 = sadd.s32 %s369, %s370
          %s372 = smul.u32 32, %s371
          %s374 = ssub.s32 4096, 4096
          %375 = vsyncadd %s361, %s374
          %s376 = smul.addr %s372, 2
          %s377 = smul.addr %s367, 128
          %s378 = sadd.s32 %s376, %s377
          %s379 = smul.addr %s378, 64
          %s380 = scalar_lea.hbm %s5, %s379
          %s381 = sshll.u32 %s364, 4
          %s382 = int_to_ptr.vmem [resolvable:$true] %s381
          %387 = dma.hbm_to_vmem [thread:$0]  %s380, 4096, %s382, %s361, 128, 128, 8
        $region32: #{tpu_custom_call.1} parent=19 // pred_fallthru
          _
        // Predicated region
        $region33: #{tpu_custom_call.1} parent=19 // pred_check
          %p388 = pneg %p228
        $region34: #{tpu_custom_call.1} parent=19 // pred_check_branch
          %390 = sbr.rel (%p388) target = $region36
        $region35: #{tpu_custom_call.1} parent=19 // pred_region
          %s391 = smul.u32 %s34, 8
          %s392 = sadd.s32 %s391, %s35
          %s393 = sld [smem:[#allocation4 + %s392]]
          %s394 = smul.u32 2, %s34
          %p395 = scmp.lt.s32.totalorder %s393, 7
          %s396 = scalar_select %p395, %s393, 7
          %p397 = scmp.lt.s32.totalorder %s394, 1
          %s398 = scalar_select %p397, %s394, 1
          %s399 = smul.addr %s396, 2
          %s400 = sadd.s32 %s398, %s399
          %s401 = smul.addr %s400, 8
          %s402 = scalar_lea.vmem %s6, %s401
          %s403 = smul.u32 %s34, 8
          %s404 = sadd.s32 %s403, %s35
          %s405 = sld [smem:[#allocation4 + %s404]]
          %s406 = smul.u32 2, %s34
        $region36: #{tpu_custom_call.1} parent=19 // pred_fallthru
          _
      $region20: #{tpu_custom_call.1} parent=5 // pred_fallthru
        _
      %p407 = scmp.le.s32.totalorder 1, %s27
      %p408 = scmp.lt.s32.totalorder %s27, 17
      %p409 = pnand %p407, %p408
      %p410 = pneg %p409
      // Predicated region
      $region37: #{tpu_custom_call.1} parent=5 // pred_check
        _
      $region38: #{tpu_custom_call.1} parent=5 // pred_check_branch
        %412 = sbr.rel (%p409) target = $region40
      $region39: #{tpu_custom_call.1} parent=5 // pred_region
        %s413 = ssub.s32 %s27, 1
        // Predicated region
        $region41: #{tpu_custom_call.1} parent=39 // pred_check
          %p414 = pneg %p72
        $region42: #{tpu_custom_call.1} parent=39 // pred_check_branch
          %416 = sbr.rel (%p414) target = $region44
        $region43: #{tpu_custom_call.1} parent=39 // pred_region
          %417 = dma.done [#allocation7], 256
        $region44: #{tpu_custom_call.1} parent=39 // pred_fallthru
          _
        %s418 = sand.u32 %s32, 1
        %s419 = scalar_lea.sflag [#allocation10], %s418
        %s420 = sand.u32 %s101, 1
        %s421 = smul.addr %s420, 256
        %s422 = scalar_lea.vmem [#allocation9], %s421
        // Predicated region
        $region45: #{tpu_custom_call.1} parent=39 // pred_check
          %p423 = pneg %p114
        $region46: #{tpu_custom_call.1} parent=39 // pred_check_branch
          %425 = sbr.rel (%p423) target = $region48
        $region47: #{tpu_custom_call.1} parent=39 // pred_region
          %426 = dma.done %s419, 4096
        $region48: #{tpu_custom_call.1} parent=39 // pred_fallthru
          _
        %s427 = sand.u32 %s32, 1
        %s428 = scalar_lea.sflag [#allocation10], %s427
        %s429 = sand.u32 %s145, 1
        %s430 = smul.addr %s429, 256
        %s431 = scalar_lea.vmem [#allocation11], %s430
        // Predicated region
        $region49: #{tpu_custom_call.1} parent=39 // pred_check
          %p432 = pneg %p158
        $region50: #{tpu_custom_call.1} parent=39 // pred_check_branch
          %434 = sbr.rel (%p432) target = $region52
        $region51: #{tpu_custom_call.1} parent=39 // pred_region
          %435 = dma.done %s428, 4096
        $region52: #{tpu_custom_call.1} parent=39 // pred_fallthru
          _
        %s436 = sand.u32 %s187, 1
        %s437 = scalar_lea.sflag [#allocation13], %s436
        %s438 = sand.u32 %s187, 1
        %s439 = smul.addr %s438, 256
        %s440 = scalar_lea.vmem [#allocation12], %s439
        // Predicated region
        $region53: #{tpu_custom_call.1} parent=39 // pred_check
          %p441 = pneg %p200
        $region54: #{tpu_custom_call.1} parent=39 // pred_check_branch
          %443 = sbr.rel (%p441) target = $region56
        $region55: #{tpu_custom_call.1} parent=39 // pred_region
          %444 = dma.done %s437, 4096
        $region56: #{tpu_custom_call.1} parent=39 // pred_fallthru
          _
        %p445 = pneg %p72
        %p446 = pneg %p69
        %s447 = sand.u32 %s32, 1
        %s448 = scalar_lea.sflag [#allocation10], %s447
        %s449 = sand.u32 %s101, 1
        %s450 = smul.addr %s449, 256
        %s451 = scalar_lea.vmem [#allocation9], %s450
        %p452 = pneg %p114
        %p453 = pneg %p111
        %s454 = sand.u32 %s32, 1
        %s455 = scalar_lea.sflag [#allocation10], %s454
        %s456 = sand.u32 %s145, 1
        %s457 = smul.addr %s456, 256
        %s458 = scalar_lea.vmem [#allocation11], %s457
        %p459 = pneg %p158
        %p460 = pneg %p155
        %s461 = sand.u32 %s187, 1
        %s462 = scalar_lea.sflag [#allocation13], %s461
        %s463 = sand.u32 %s187, 1
        %s464 = smul.addr %s463, 256
        %s465 = scalar_lea.vmem [#allocation12], %s464
        %p466 = pneg %p200
        %p467 = pneg %p197
        %s468 = smul.u32 %s37, 8
        %s469 = sadd.s32 %s468, %s38
        %s470 = sld [smem:[#allocation4 + %s469]]
        %s471 = smul.u32 2, %s37
        %p472 = scmp.lt.s32.totalorder %s470, 7
        %s473 = scalar_select %p472, %s470, 7
        %p474 = scmp.lt.s32.totalorder %s471, 1
        %s475 = scalar_select %p474, %s471, 1
        %s476 = smul.addr %s473, 2
        %s477 = sadd.s32 %s475, %s476
        %s478 = smul.addr %s477, 8
        %s479 = scalar_lea.vmem %s6, %s478
        %p480 = pneg %p234
        %p481 = pneg %p231
        %p482 = pneg %p260
        %p483 = pneg %p257
        %s484 = smul.u32 2, %s37
        %s485 = smul.u32 %s37, 8
        %s486 = sadd.s32 %s485, %s38
        %s487 = sld [smem:[#allocation4 + %s486]]
        %s488 = sld [smem:[#allocation5 + %s486]]
        %s489 = smul.u32 %s39, %s488
        %s490 = ssub.s32 1, %s488
        %s491 = sadd.s32 %s489, %s490
        %s492 = smul.u32 2, %s491
        %s493 = smul.u32 %s37, 8
        %s494 = sadd.s32 %s493, %s38
        %s495 = sld [smem:[#allocation4 + %s494]]
        %s496 = sld [smem:[#allocation5 + %s494]]
        %s497 = smul.u32 %s39, %s496
        %s498 = ssub.s32 1, %s496
        %s499 = sadd.s32 %s497, %s498
        %s500 = sadd.s32 %s499, 2
        %s501 = smul.u32 2, %s500
        %s502 = smul.u32 %s37, 8
        %s503 = sadd.s32 %s502, %s38
        %s504 = sld [smem:[#allocation4 + %s503]]
        %s505 = sld [smem:[#allocation5 + %s503]]
        %s506 = smul.u32 %s39, %s505
        %s507 = ssub.s32 1, %s505
        %s508 = sadd.s32 %s506, %s507
        %s509 = smul.u32 32, %s508
        %s510 = smul.u32 %s37, 8
        %s511 = sadd.s32 %s510, %s38
        %s512 = sld [smem:[#allocation4 + %s511]]
        %s513 = smul.u32 2, %s37
        %p514 = scmp.lt.s32.totalorder %s512, 7
        %s515 = scalar_select %p514, %s512, 7
        %p516 = scmp.lt.s32.totalorder %s513, 1
        %s517 = scalar_select %p516, %s513, 1
        %s518 = smul.addr %s515, 2
        %s519 = sadd.s32 %s517, %s518
        %s520 = smul.addr %s519, 8
        %s521 = scalar_lea.vmem %s6, %s520
        %s522 = smul.u32 %s37, 8
        %s523 = sadd.s32 %s522, %s38
        %s524 = sld [smem:[#allocation4 + %s523]]
        %s525 = smul.u32 2, %s37
        %s526 = smul.u32 2, %s37
        %p527 = scmp.eq.s32.totalorder %s38, 0
        %p528 = scmp.eq.s32.totalorder %s39, 0
        %p529 = pnand %p527, %p528
        %p530 = pneg %p529
        // Predicated region
        $region57: #{tpu_custom_call.1} parent=39 // pred_check
          _
        $region58: #{tpu_custom_call.1} parent=39 // pred_check_branch
          %532 = sbr.rel (%p529) target = $region60
        $region59: #{tpu_custom_call.1} parent=39 // pred_region
          %533 = vst [vmem:[#allocation2] sm:$0xff] 0.0
          %534 = vst [vmem:[#allocation2 + $0x8] sm:$0xff] 0.0
          %535 = vst [vmem:[#allocation2 + $0x10] sm:$0xff] 0.0
          %536 = vst [vmem:[#allocation2 + $0x18] sm:$0xff] 0.0
        $region60: #{tpu_custom_call.1} parent=39 // pred_fallthru
          _
        %s537 = smul.u32 %s37, 8
        %s538 = sadd.s32 %s537, %s38
        %s539 = sld [smem:[#allocation5 + %s538]]
        %p540 = scmp.gt.s32.totalorder %s539, 0
        // Predicated region
        $region61: #{tpu_custom_call.1} parent=39 // pred_check
          %p541 = pneg %p540
        $region62: #{tpu_custom_call.1} parent=39 // pred_check_branch
          %543 = sbr.rel (%p541) target = $region64
        $region63: #{tpu_custom_call.1} parent=39 // pred_region
          %v544 = vld [vmem:[#allocation6] sm:$0xff]
          %v545 = vld [vmem:[#allocation6 + $0x8] sm:$0xff]
          %v546 = vld [vmem:[%s422] sm:$0xff]
          %v547 = vld [vmem:[%s422 + $0x8] sm:$0xff]
          %v548 = vld [vmem:[%s422 + $0x10] sm:$0xff]
          %v549 = vld [vmem:[%s422 + $0x18] sm:$0xff]
          %v550 = vld [vmem:[%s422 + $0x20] sm:$0xff]
          %v551 = vld [vmem:[%s422 + $0x28] sm:$0xff]
          %v552 = vld [vmem:[%s422 + $0x30] sm:$0xff]
          %v553 = vld [vmem:[%s422 + $0x38] sm:$0xff]
          %v554 = vld [vmem:[%s422 + $0x40] sm:$0xff]
          %v555 = vld [vmem:[%s422 + $0x48] sm:$0xff]
          %v556 = vld [vmem:[%s422 + $0x50] sm:$0xff]
          %v557 = vld [vmem:[%s422 + $0x58] sm:$0xff]
          %v558 = vld [vmem:[%s422 + $0x60] sm:$0xff]
          %v559 = vld [vmem:[%s422 + $0x68] sm:$0xff]
          %v560 = vld [vmem:[%s422 + $0x70] sm:$0xff]
          %v561 = vld [vmem:[%s422 + $0x78] sm:$0xff]
          %v562 = vld [vmem:[%s422 + $0x80] sm:$0xff]
          %v563 = vld [vmem:[%s422 + $0x88] sm:$0xff]
          %v564 = vld [vmem:[%s422 + $0x90] sm:$0xff]
          %v565 = vld [vmem:[%s422 + $0x98] sm:$0xff]
          %v566 = vld [vmem:[%s422 + $0xa0] sm:$0xff]
          %v567 = vld [vmem:[%s422 + $0xa8] sm:$0xff]
          %v568 = vld [vmem:[%s422 + $0xb0] sm:$0xff]
          %v569 = vld [vmem:[%s422 + $0xb8] sm:$0xff]
          %v570 = vld [vmem:[%s422 + $0xc0] sm:$0xff]
          %v571 = vld [vmem:[%s422 + $0xc8] sm:$0xff]
          %v572 = vld [vmem:[%s422 + $0xd0] sm:$0xff]
          %v573 = vld [vmem:[%s422 + $0xd8] sm:$0xff]
          %v574 = vld [vmem:[%s422 + $0xe0] sm:$0xff]
          %v575 = vld [vmem:[%s422 + $0xe8] sm:$0xff]
          %v576 = vld [vmem:[%s422 + $0xf0] sm:$0xff]
          %v577 = vld [vmem:[%s422 + $0xf8] sm:$0xff]
          %v580 = vunpack.c.l.b16 %v544
          %v581 = vunpack.c.h.b16 %v544
          %v582 = vunpack.c.l.b16 %v545
          %v583 = vunpack.c.h.b16 %v545
          %v584 = vpack.c.b16 %v582, %v580
          %v585 = vpack.c.b16 %v583, %v581
          %v620 = vunpack.c.l.b16 %v546
          %v621 = vunpack.c.h.b16 %v546
          %v622 = vunpack.c.l.b16 %v547
          %v623 = vunpack.c.h.b16 %v547
          %v624 = vunpack.c.l.b16 %v548
          %v625 = vunpack.c.h.b16 %v548
          %v626 = vunpack.c.l.b16 %v549
          %v627 = vunpack.c.h.b16 %v549
          %v628 = vunpack.c.l.b16 %v550
          %v629 = vunpack.c.h.b16 %v550
          %v630 = vunpack.c.l.b16 %v551
          %v631 = vunpack.c.h.b16 %v551
          %v632 = vunpack.c.l.b16 %v552
          %v633 = vunpack.c.h.b16 %v552
          %v634 = vunpack.c.l.b16 %v553
          %v635 = vunpack.c.h.b16 %v553
          %v636 = vunpack.c.l.b16 %v554
          %v637 = vunpack.c.h.b16 %v554
          %v638 = vunpack.c.l.b16 %v555
          %v639 = vunpack.c.h.b16 %v555
          %v640 = vunpack.c.l.b16 %v556
          %v641 = vunpack.c.h.b16 %v556
          %v642 = vunpack.c.l.b16 %v557
          %v643 = vunpack.c.h.b16 %v557
          %v644 = vunpack.c.l.b16 %v558
          %v645 = vunpack.c.h.b16 %v558
          %v646 = vunpack.c.l.b16 %v559
          %v647 = vunpack.c.h.b16 %v559
          %v648 = vunpack.c.l.b16 %v560
          %v649 = vunpack.c.h.b16 %v560
          %v650 = vunpack.c.l.b16 %v561
          %v651 = vunpack.c.h.b16 %v561
          %v652 = vunpack.c.l.b16 %v562
          %v653 = vunpack.c.h.b16 %v562
          %v654 = vunpack.c.l.b16 %v563
          %v655 = vunpack.c.h.b16 %v563
          %v656 = vunpack.c.l.b16 %v564
          %v657 = vunpack.c.h.b16 %v564
          %v658 = vunpack.c.l.b16 %v565
          %v659 = vunpack.c.h.b16 %v565
          %v660 = vunpack.c.l.b16 %v566
          %v661 = vunpack.c.h.b16 %v566
          %v662 = vunpack.c.l.b16 %v567
          %v663 = vunpack.c.h.b16 %v567
          %v664 = vunpack.c.l.b16 %v568
          %v665 = vunpack.c.h.b16 %v568
          %v666 = vunpack.c.l.b16 %v569
          %v667 = vunpack.c.h.b16 %v569
          %v668 = vunpack.c.l.b16 %v570
          %v669 = vunpack.c.h.b16 %v570
          %v670 = vunpack.c.l.b16 %v571
          %v671 = vunpack.c.h.b16 %v571
          %v672 = vunpack.c.l.b16 %v572
          %v673 = vunpack.c.h.b16 %v572
          %v674 = vunpack.c.l.b16 %v573
          %v675 = vunpack.c.h.b16 %v573
          %v676 = vunpack.c.l.b16 %v574
          %v677 = vunpack.c.h.b16 %v574
          %v678 = vunpack.c.l.b16 %v575
          %v679 = vunpack.c.h.b16 %v575
          %v680 = vunpack.c.l.b16 %v576
          %v681 = vunpack.c.h.b16 %v576
          %v682 = vunpack.c.l.b16 %v577
          %v683 = vunpack.c.h.b16 %v577
          %v684 = vpack.c.b16 %v622, %v620
          %v685 = vpack.c.b16 %v623, %v621
          %v686 = vpack.c.b16 %v626, %v624
          %v687 = vpack.c.b16 %v627, %v625
          %v688 = vpack.c.b16 %v630, %v628
          %v689 = vpack.c.b16 %v631, %v629
          %v690 = vpack.c.b16 %v634, %v632
          %v691 = vpack.c.b16 %v635, %v633
          %v692 = vpack.c.b16 %v638, %v636
          %v693 = vpack.c.b16 %v639, %v637
          %v694 = vpack.c.b16 %v642, %v640
          %v695 = vpack.c.b16 %v643, %v641
          %v696 = vpack.c.b16 %v646, %v644
          %v697 = vpack.c.b16 %v647, %v645
          %v698 = vpack.c.b16 %v650, %v648
          %v699 = vpack.c.b16 %v651, %v649
          %v700 = vpack.c.b16 %v654, %v652
          %v701 = vpack.c.b16 %v655, %v653
          %v702 = vpack.c.b16 %v658, %v656
          %v703 = vpack.c.b16 %v659, %v657
          %v704 = vpack.c.b16 %v662, %v660
          %v705 = vpack.c.b16 %v663, %v661
          %v706 = vpack.c.b16 %v666, %v664
          %v707 = vpack.c.b16 %v667, %v665
          %v708 = vpack.c.b16 %v670, %v668
          %v709 = vpack.c.b16 %v671, %v669
          %v710 = vpack.c.b16 %v674, %v672
          %v711 = vpack.c.b16 %v675, %v673
          %v712 = vpack.c.b16 %v678, %v676
          %v713 = vpack.c.b16 %v679, %v677
          %v714 = vpack.c.b16 %v682, %v680
          %v715 = vpack.c.b16 %v683, %v681
          %748 = vmatprep.subr.bf16.mxu0 %v685
          %749 = vmatpush1.bf16.msra.mxu0 %v684
          %750 = vmatprep.subr.bf16.mxu0 %v687
          %751 = vmatpush1.bf16.msra.mxu0 %v686
          %752 = vmatprep.subr.bf16.mxu0 %v689
          %753 = vmatpush1.bf16.msra.mxu0 %v688
          %754 = vmatprep.subr.bf16.mxu0 %v691
          %755 = vmatpush1.bf16.msra.mxu0 %v690
          %756 = vmatprep.subr.bf16.mxu0 %v693
          %757 = vmatpush1.bf16.msra.mxu0 %v692
          %758 = vmatprep.subr.bf16.mxu0 %v695
          %759 = vmatpush1.bf16.msra.mxu0 %v694
          %760 = vmatprep.subr.bf16.mxu0 %v697
          %761 = vmatpush1.bf16.msra.mxu0 %v696
          %762 = vmatprep.subr.bf16.mxu0 %v699
          %763 = vmatpush1.bf16.msra.mxu0 %v698
          %764 = vmatprep.subr.bf16.mxu0 %v701
          %765 = vmatpush1.bf16.msra.mxu0 %v700
          %766 = vmatprep.subr.bf16.mxu0 %v703
          %767 = vmatpush1.bf16.msra.mxu0 %v702
          %768 = vmatprep.subr.bf16.mxu0 %v705
          %769 = vmatpush1.bf16.msra.mxu0 %v704
          %770 = vmatprep.subr.bf16.mxu0 %v707
          %771 = vmatpush1.bf16.msra.mxu0 %v706
          %772 = vmatprep.subr.bf16.mxu0 %v709
          %773 = vmatpush1.bf16.msra.mxu0 %v708
          %774 = vmatprep.subr.bf16.mxu0 %v711
          %775 = vmatpush1.bf16.msra.mxu0 %v710
          %776 = vmatprep.subr.bf16.mxu0 %v713
          %777 = vmatpush1.bf16.msra.mxu0 %v712
          %778 = vmatprep.subr.bf16.mxu0 %v715
          %779 = vmatpush1.bf16.msra.mxu0 %v714
          %780 = vmatprep.mubr.bf16.mxu0 %v585
          %781 = vmatmul.mubr.bf16.gmra.mrb[0].mxu0 %v584
          %v782 = vpop.f32.mrb[0].mxu0
          %v783 = vadd.f32 0.0, %v782
          %v784 = vpop.f32.mrb[0].mxu0
          %v785 = vadd.f32 0.0, %v784
          %v786 = vpop.f32.mrb[0].mxu0
          %v787 = vadd.f32 0.0, %v786
          %v788 = vpop.f32.mrb[0].mxu0
          %v789 = vadd.f32 0.0, %v788
          %790 = vdwg.mxu0
          %v791 = vld [vmem:[%s431] sm:$0xff]
          %v792 = vld [vmem:[%s431 + $0x8] sm:$0xff]
          %v793 = vld [vmem:[%s431 + $0x10] sm:$0xff]
          %v794 = vld [vmem:[%s431 + $0x18] sm:$0xff]
          %v795 = vld [vmem:[%s431 + $0x20] sm:$0xff]
          %v796 = vld [vmem:[%s431 + $0x28] sm:$0xff]
          %v797 = vld [vmem:[%s431 + $0x30] sm:$0xff]
          %v798 = vld [vmem:[%s431 + $0x38] sm:$0xff]
          %v799 = vld [vmem:[%s431 + $0x40] sm:$0xff]
          %v800 = vld [vmem:[%s431 + $0x48] sm:$0xff]
          %v801 = vld [vmem:[%s431 + $0x50] sm:$0xff]
          %v802 = vld [vmem:[%s431 + $0x58] sm:$0xff]
          %v803 = vld [vmem:[%s431 + $0x60] sm:$0xff]
          %v804 = vld [vmem:[%s431 + $0x68] sm:$0xff]
          %v805 = vld [vmem:[%s431 + $0x70] sm:$0xff]
          %v806 = vld [vmem:[%s431 + $0x78] sm:$0xff]
          %v807 = vld [vmem:[%s431 + $0x80] sm:$0xff]
          %v808 = vld [vmem:[%s431 + $0x88] sm:$0xff]
          %v809 = vld [vmem:[%s431 + $0x90] sm:$0xff]
          %v810 = vld [vmem:[%s431 + $0x98] sm:$0xff]
          %v811 = vld [vmem:[%s431 + $0xa0] sm:$0xff]
          %v812 = vld [vmem:[%s431 + $0xa8] sm:$0xff]
          %v813 = vld [vmem:[%s431 + $0xb0] sm:$0xff]
          %v814 = vld [vmem:[%s431 + $0xb8] sm:$0xff]
          %v815 = vld [vmem:[%s431 + $0xc0] sm:$0xff]
          %v816 = vld [vmem:[%s431 + $0xc8] sm:$0xff]
          %v817 = vld [vmem:[%s431 + $0xd0] sm:$0xff]
          %v818 = vld [vmem:[%s431 + $0xd8] sm:$0xff]
          %v819 = vld [vmem:[%s431 + $0xe0] sm:$0xff]
          %v820 = vld [vmem:[%s431 + $0xe8] sm:$0xff]
          %v821 = vld [vmem:[%s431 + $0xf0] sm:$0xff]
          %v822 = vld [vmem:[%s431 + $0xf8] sm:$0xff]
          %v855 = vunpack.c.l.b16 %v791
          %v856 = vunpack.c.h.b16 %v791
          %v857 = vunpack.c.l.b16 %v792
          %v858 = vunpack.c.h.b16 %v792
          %v859 = vunpack.c.l.b16 %v793
          %v860 = vunpack.c.h.b16 %v793
          %v861 = vunpack.c.l.b16 %v794
          %v862 = vunpack.c.h.b16 %v794
          %v863 = vunpack.c.l.b16 %v795
          %v864 = vunpack.c.h.b16 %v795
          %v865 = vunpack.c.l.b16 %v796
          %v866 = vunpack.c.h.b16 %v796
          %v867 = vunpack.c.l.b16 %v797
          %v868 = vunpack.c.h.b16 %v797
          %v869 = vunpack.c.l.b16 %v798
          %v870 = vunpack.c.h.b16 %v798
          %v871 = vunpack.c.l.b16 %v799
          %v872 = vunpack.c.h.b16 %v799
          %v873 = vunpack.c.l.b16 %v800
          %v874 = vunpack.c.h.b16 %v800
          %v875 = vunpack.c.l.b16 %v801
          %v876 = vunpack.c.h.b16 %v801
          %v877 = vunpack.c.l.b16 %v802
          %v878 = vunpack.c.h.b16 %v802
          %v879 = vunpack.c.l.b16 %v803
          %v880 = vunpack.c.h.b16 %v803
          %v881 = vunpack.c.l.b16 %v804
          %v882 = vunpack.c.h.b16 %v804
          %v883 = vunpack.c.l.b16 %v805
          %v884 = vunpack.c.h.b16 %v805
          %v885 = vunpack.c.l.b16 %v806
          %v886 = vunpack.c.h.b16 %v806
          %v887 = vunpack.c.l.b16 %v807
          %v888 = vunpack.c.h.b16 %v807
          %v889 = vunpack.c.l.b16 %v808
          %v890 = vunpack.c.h.b16 %v808
          %v891 = vunpack.c.l.b16 %v809
          %v892 = vunpack.c.h.b16 %v809
          %v893 = vunpack.c.l.b16 %v810
          %v894 = vunpack.c.h.b16 %v810
          %v895 = vunpack.c.l.b16 %v811
          %v896 = vunpack.c.h.b16 %v811
          %v897 = vunpack.c.l.b16 %v812
          %v898 = vunpack.c.h.b16 %v812
          %v899 = vunpack.c.l.b16 %v813
          %v900 = vunpack.c.h.b16 %v813
          %v901 = vunpack.c.l.b16 %v814
          %v902 = vunpack.c.h.b16 %v814
          %v903 = vunpack.c.l.b16 %v815
          %v904 = vunpack.c.h.b16 %v815
          %v905 = vunpack.c.l.b16 %v816
          %v906 = vunpack.c.h.b16 %v816
          %v907 = vunpack.c.l.b16 %v817
          %v908 = vunpack.c.h.b16 %v817
          %v909 = vunpack.c.l.b16 %v818
          %v910 = vunpack.c.h.b16 %v818
          %v911 = vunpack.c.l.b16 %v819
          %v912 = vunpack.c.h.b16 %v819
          %v913 = vunpack.c.l.b16 %v820
          %v914 = vunpack.c.h.b16 %v820
          %v915 = vunpack.c.l.b16 %v821
          %v916 = vunpack.c.h.b16 %v821
          %v917 = vunpack.c.l.b16 %v822
          %v918 = vunpack.c.h.b16 %v822
          %v919 = vpack.c.b16 %v857, %v855
          %v920 = vpack.c.b16 %v858, %v856
          %v921 = vpack.c.b16 %v861, %v859
          %v922 = vpack.c.b16 %v862, %v860
          %v923 = vpack.c.b16 %v865, %v863
          %v924 = vpack.c.b16 %v866, %v864
          %v925 = vpack.c.b16 %v869, %v867
          %v926 = vpack.c.b16 %v870, %v868
          %v927 = vpack.c.b16 %v873, %v871
          %v928 = vpack.c.b16 %v874, %v872
          %v929 = vpack.c.b16 %v877, %v875
          %v930 = vpack.c.b16 %v878, %v876
          %v931 = vpack.c.b16 %v881, %v879
          %v932 = vpack.c.b16 %v882, %v880
          %v933 = vpack.c.b16 %v885, %v883
          %v934 = vpack.c.b16 %v886, %v884
          %v935 = vpack.c.b16 %v889, %v887
          %v936 = vpack.c.b16 %v890, %v888
          %v937 = vpack.c.b16 %v893, %v891
          %v938 = vpack.c.b16 %v894, %v892
          %v939 = vpack.c.b16 %v897, %v895
          %v940 = vpack.c.b16 %v898, %v896
          %v941 = vpack.c.b16 %v901, %v899
          %v942 = vpack.c.b16 %v902, %v900
          %v943 = vpack.c.b16 %v905, %v903
          %v944 = vpack.c.b16 %v906, %v904
          %v945 = vpack.c.b16 %v909, %v907
          %v946 = vpack.c.b16 %v910, %v908
          %v947 = vpack.c.b16 %v913, %v911
          %v948 = vpack.c.b16 %v914, %v912
          %v949 = vpack.c.b16 %v917, %v915
          %v950 = vpack.c.b16 %v918, %v916
          %983 = vmatprep.subr.bf16.mxu0 %v920
          %984 = vmatpush1.bf16.msra.mxu0 %v919
          %985 = vmatprep.subr.bf16.mxu0 %v922
          %986 = vmatpush1.bf16.msra.mxu0 %v921
          %987 = vmatprep.subr.bf16.mxu0 %v924
          %988 = vmatpush1.bf16.msra.mxu0 %v923
          %989 = vmatprep.subr.bf16.mxu0 %v926
          %990 = vmatpush1.bf16.msra.mxu0 %v925
          %991 = vmatprep.subr.bf16.mxu0 %v928
          %992 = vmatpush1.bf16.msra.mxu0 %v927
          %993 = vmatprep.subr.bf16.mxu0 %v930
          %994 = vmatpush1.bf16.msra.mxu0 %v929
          %995 = vmatprep.subr.bf16.mxu0 %v932
          %996 = vmatpush1.bf16.msra.mxu0 %v931
          %997 = vmatprep.subr.bf16.mxu0 %v934
          %998 = vmatpush1.bf16.msra.mxu0 %v933
          %999 = vmatprep.subr.bf16.mxu0 %v936
          %1000 = vmatpush1.bf16.msra.mxu0 %v935
          %1001 = vmatprep.subr.bf16.mxu0 %v938
          %1002 = vmatpush1.bf16.msra.mxu0 %v937
          %1003 = vmatprep.subr.bf16.mxu0 %v940
          %1004 = vmatpush1.bf16.msra.mxu0 %v939
          %1005 = vmatprep.subr.bf16.mxu0 %v942
          %1006 = vmatpush1.bf16.msra.mxu0 %v941
          %1007 = vmatprep.subr.bf16.mxu0 %v944
          %1008 = vmatpush1.bf16.msra.mxu0 %v943
          %1009 = vmatprep.subr.bf16.mxu0 %v946
          %1010 = vmatpush1.bf16.msra.mxu0 %v945
          %1011 = vmatprep.subr.bf16.mxu0 %v948
          %1012 = vmatpush1.bf16.msra.mxu0 %v947
          %1013 = vmatprep.subr.bf16.mxu0 %v950
          %1014 = vmatpush1.bf16.msra.mxu0 %v949
          %1015 = vmatprep.mubr.bf16.mxu0 %v585
          %1016 = vmatmul.mubr.bf16.gmra.mrb[0].mxu0 %v584
          %v1017 = vpop.f32.mrb[0].mxu0
          %v1018 = vadd.f32 0.0, %v1017
          %v1019 = vpop.f32.mrb[0].mxu0
          %v1020 = vadd.f32 0.0, %v1019
          %v1021 = vpop.f32.mrb[0].mxu0
          %v1022 = vadd.f32 0.0, %v1021
          %v1023 = vpop.f32.mrb[0].mxu0
          %v1024 = vadd.f32 0.0, %v1023
          %1025 = vdwg.mxu0
          %v1026 = vxor.u32 %v783, 2147483648
          %v1027 = vxor.u32 %v785, 2147483648
          %v1028 = vxor.u32 %v787, 2147483648
          %v1029 = vxor.u32 %v789, 2147483648
          %v1030 = vmul.f32 %v1026, 1.442695
          %v1031 = vpow.pop %v1030
          %v1032 = vmul.f32 %v1027, 1.442695
          %v1033 = vpow.pop %v1032
          %v1034 = vmul.f32 %v1028, 1.442695
          %v1035 = vpow.pop %v1034
          %v1036 = vmul.f32 %v1029, 1.442695
          %v1037 = vpow.pop %v1036
          %v1038 = vadd.f32 %v1031, 1.0
          %v1039 = vadd.f32 %v1033, 1.0
          %v1040 = vadd.f32 %v1035, 1.0
          %v1041 = vadd.f32 %v1037, 1.0
          %v1042 = vrcp.pop %v1038
          %v1043 = vmul.f32 1.0, %v1042
          %v1044 = vrcp.pop %v1039
          %v1045 = vmul.f32 1.0, %v1044
          %v1046 = vrcp.pop %v1040
          %v1047 = vmul.f32 1.0, %v1046
          %v1048 = vrcp.pop %v1041
          %v1049 = vmul.f32 1.0, %v1048
          %v1050 = vmul.f32 %v783, %v1043
          %v1051 = vmul.f32 %v785, %v1045
          %v1052 = vmul.f32 %v787, %v1047
          %v1053 = vmul.f32 %v789, %v1049
          %v1054 = vmul.f32 %v1050, %v1018
          %v1055 = vmul.f32 %v1051, %v1020
          %v1056 = vmul.f32 %v1052, %v1022
          %v1057 = vmul.f32 %v1053, %v1024
          %v1058 = vld [vmem:[%s521] sm:$0xff]
          %v1059 = vld [vmem:[%s521 + $0x8] sm:$0xff]
          %1061 = vset.pattern.permute.xlu0 0
          %1062 = vperm.xlu0 %1061, %v1058
          %v1063 = vpop.permute.xlu0 %1062
          %1066 = vset.pattern.permute.xlu0 0
          %1067 = vperm.xlu0 %1066, %v1059
          %v1068 = vpop.permute.xlu0 %1067
          %v1070 = vmul.f32 %v1054, %v1063
          %v1071 = vmul.f32 %v1055, %v1063
          %v1072 = vmul.f32 %v1056, %v1068
          %v1073 = vmul.f32 %v1057, %v1068
          %v1074 = vld [vmem:[#allocation2] sm:$0xff]
          %v1075 = vld [vmem:[#allocation2 + $0x8] sm:$0xff]
          %v1076 = vld [vmem:[#allocation2 + $0x10] sm:$0xff]
          %v1077 = vld [vmem:[#allocation2 + $0x18] sm:$0xff]
          %v1078 = vpack.c.bf16 %v1072, %v1070
          %v1079 = vpack.c.bf16 %v1073, %v1071
          %v1080 = vld [vmem:[%s440] sm:$0xff]
          %v1081 = vld [vmem:[%s440 + $0x8] sm:$0xff]
          %v1082 = vld [vmem:[%s440 + $0x10] sm:$0xff]
          %v1083 = vld [vmem:[%s440 + $0x18] sm:$0xff]
          %v1084 = vld [vmem:[%s440 + $0x20] sm:$0xff]
          %v1085 = vld [vmem:[%s440 + $0x28] sm:$0xff]
          %v1086 = vld [vmem:[%s440 + $0x30] sm:$0xff]
          %v1087 = vld [vmem:[%s440 + $0x38] sm:$0xff]
          %v1088 = vld [vmem:[%s440 + $0x40] sm:$0xff]
          %v1089 = vld [vmem:[%s440 + $0x48] sm:$0xff]
          %v1090 = vld [vmem:[%s440 + $0x50] sm:$0xff]
          %v1091 = vld [vmem:[%s440 + $0x58] sm:$0xff]
          %v1092 = vld [vmem:[%s440 + $0x60] sm:$0xff]
          %v1093 = vld [vmem:[%s440 + $0x68] sm:$0xff]
          %v1094 = vld [vmem:[%s440 + $0x70] sm:$0xff]
          %v1095 = vld [vmem:[%s440 + $0x78] sm:$0xff]
          %v1096 = vld [vmem:[%s440 + $0x80] sm:$0xff]
          %v1097 = vld [vmem:[%s440 + $0x88] sm:$0xff]
          %v1098 = vld [vmem:[%s440 + $0x90] sm:$0xff]
          %v1099 = vld [vmem:[%s440 + $0x98] sm:$0xff]
          %v1100 = vld [vmem:[%s440 + $0xa0] sm:$0xff]
          %v1101 = vld [vmem:[%s440 + $0xa8] sm:$0xff]
          %v1102 = vld [vmem:[%s440 + $0xb0] sm:$0xff]
          %v1103 = vld [vmem:[%s440 + $0xb8] sm:$0xff]
          %v1104 = vld [vmem:[%s440 + $0xc0] sm:$0xff]
          %v1105 = vld [vmem:[%s440 + $0xc8] sm:$0xff]
          %v1106 = vld [vmem:[%s440 + $0xd0] sm:$0xff]
          %v1107 = vld [vmem:[%s440 + $0xd8] sm:$0xff]
          %v1108 = vld [vmem:[%s440 + $0xe0] sm:$0xff]
          %v1109 = vld [vmem:[%s440 + $0xe8] sm:$0xff]
          %v1110 = vld [vmem:[%s440 + $0xf0] sm:$0xff]
          %v1111 = vld [vmem:[%s440 + $0xf8] sm:$0xff]
          %v1144 = vunpack.c.l.b16 %v1080
          %v1145 = vunpack.c.h.b16 %v1080
          %v1146 = vunpack.c.l.b16 %v1081
          %v1147 = vunpack.c.h.b16 %v1081
          %v1148 = vunpack.c.l.b16 %v1082
          %v1149 = vunpack.c.h.b16 %v1082
          %v1150 = vunpack.c.l.b16 %v1083
          %v1151 = vunpack.c.h.b16 %v1083
          %v1152 = vunpack.c.l.b16 %v1084
          %v1153 = vunpack.c.h.b16 %v1084
          %v1154 = vunpack.c.l.b16 %v1085
          %v1155 = vunpack.c.h.b16 %v1085
          %v1156 = vunpack.c.l.b16 %v1086
          %v1157 = vunpack.c.h.b16 %v1086
          %v1158 = vunpack.c.l.b16 %v1087
          %v1159 = vunpack.c.h.b16 %v1087
          %v1160 = vunpack.c.l.b16 %v1088
          %v1161 = vunpack.c.h.b16 %v1088
          %v1162 = vunpack.c.l.b16 %v1089
          %v1163 = vunpack.c.h.b16 %v1089
          %v1164 = vunpack.c.l.b16 %v1090
          %v1165 = vunpack.c.h.b16 %v1090
          %v1166 = vunpack.c.l.b16 %v1091
          %v1167 = vunpack.c.h.b16 %v1091
          %v1168 = vunpack.c.l.b16 %v1092
          %v1169 = vunpack.c.h.b16 %v1092
          %v1170 = vunpack.c.l.b16 %v1093
          %v1171 = vunpack.c.h.b16 %v1093
          %v1172 = vunpack.c.l.b16 %v1094
          %v1173 = vunpack.c.h.b16 %v1094
          %v1174 = vunpack.c.l.b16 %v1095
          %v1175 = vunpack.c.h.b16 %v1095
          %v1176 = vunpack.c.l.b16 %v1096
          %v1177 = vunpack.c.h.b16 %v1096
          %v1178 = vunpack.c.l.b16 %v1097
          %v1179 = vunpack.c.h.b16 %v1097
          %v1180 = vunpack.c.l.b16 %v1098
          %v1181 = vunpack.c.h.b16 %v1098
          %v1182 = vunpack.c.l.b16 %v1099
          %v1183 = vunpack.c.h.b16 %v1099
          %v1184 = vunpack.c.l.b16 %v1100
          %v1185 = vunpack.c.h.b16 %v1100
          %v1186 = vunpack.c.l.b16 %v1101
          %v1187 = vunpack.c.h.b16 %v1101
          %v1188 = vunpack.c.l.b16 %v1102
          %v1189 = vunpack.c.h.b16 %v1102
          %v1190 = vunpack.c.l.b16 %v1103
          %v1191 = vunpack.c.h.b16 %v1103
          %v1192 = vunpack.c.l.b16 %v1104
          %v1193 = vunpack.c.h.b16 %v1104
          %v1194 = vunpack.c.l.b16 %v1105
          %v1195 = vunpack.c.h.b16 %v1105
          %v1196 = vunpack.c.l.b16 %v1106
          %v1197 = vunpack.c.h.b16 %v1106
          %v1198 = vunpack.c.l.b16 %v1107
          %v1199 = vunpack.c.h.b16 %v1107
          %v1200 = vunpack.c.l.b16 %v1108
          %v1201 = vunpack.c.h.b16 %v1108
          %v1202 = vunpack.c.l.b16 %v1109
          %v1203 = vunpack.c.h.b16 %v1109
          %v1204 = vunpack.c.l.b16 %v1110
          %v1205 = vunpack.c.h.b16 %v1110
          %v1206 = vunpack.c.l.b16 %v1111
          %v1207 = vunpack.c.h.b16 %v1111
          %v1208 = vpack.c.b16 %v1146, %v1144
          %v1209 = vpack.c.b16 %v1147, %v1145
          %v1210 = vpack.c.b16 %v1150, %v1148
          %v1211 = vpack.c.b16 %v1151, %v1149
          %v1212 = vpack.c.b16 %v1154, %v1152
          %v1213 = vpack.c.b16 %v1155, %v1153
          %v1214 = vpack.c.b16 %v1158, %v1156
          %v1215 = vpack.c.b16 %v1159, %v1157
          %v1216 = vpack.c.b16 %v1162, %v1160
          %v1217 = vpack.c.b16 %v1163, %v1161
          %v1218 = vpack.c.b16 %v1166, %v1164
          %v1219 = vpack.c.b16 %v1167, %v1165
          %v1220 = vpack.c.b16 %v1170, %v1168
          %v1221 = vpack.c.b16 %v1171, %v1169
          %v1222 = vpack.c.b16 %v1174, %v1172
          %v1223 = vpack.c.b16 %v1175, %v1173
          %v1224 = vpack.c.b16 %v1178, %v1176
          %v1225 = vpack.c.b16 %v1179, %v1177
          %v1226 = vpack.c.b16 %v1182, %v1180
          %v1227 = vpack.c.b16 %v1183, %v1181
          %v1228 = vpack.c.b16 %v1186, %v1184
          %v1229 = vpack.c.b16 %v1187, %v1185
          %v1230 = vpack.c.b16 %v1190, %v1188
          %v1231 = vpack.c.b16 %v1191, %v1189
          %v1232 = vpack.c.b16 %v1194, %v1192
          %v1233 = vpack.c.b16 %v1195, %v1193
          %v1234 = vpack.c.b16 %v1198, %v1196
          %v1235 = vpack.c.b16 %v1199, %v1197
          %v1236 = vpack.c.b16 %v1202, %v1200
          %v1237 = vpack.c.b16 %v1203, %v1201
          %v1238 = vpack.c.b16 %v1206, %v1204
          %v1239 = vpack.c.b16 %v1207, %v1205
          %1272 = vmatprep.subr.bf16.mxu0 %v1209
          %1273 = vmatpush1.bf16.msra.mxu0 %v1208
          %1274 = vmatprep.subr.bf16.mxu0 %v1211
          %1275 = vmatpush1.bf16.msra.mxu0 %v1210
          %1276 = vmatprep.subr.bf16.mxu0 %v1213
          %1277 = vmatpush1.bf16.msra.mxu0 %v1212
          %1278 = vmatprep.subr.bf16.mxu0 %v1215
          %1279 = vmatpush1.bf16.msra.mxu0 %v1214
          %1280 = vmatprep.subr.bf16.mxu0 %v1217
          %1281 = vmatpush1.bf16.msra.mxu0 %v1216
          %1282 = vmatprep.subr.bf16.mxu0 %v1219
          %1283 = vmatpush1.bf16.msra.mxu0 %v1218
          %1284 = vmatprep.subr.bf16.mxu0 %v1221
          %1285 = vmatpush1.bf16.msra.mxu0 %v1220
          %1286 = vmatprep.subr.bf16.mxu0 %v1223
          %1287 = vmatpush1.bf16.msra.mxu0 %v1222
          %1288 = vmatprep.subr.bf16.mxu0 %v1225
          %1289 = vmatpush1.bf16.msra.mxu0 %v1224
          %1290 = vmatprep.subr.bf16.mxu0 %v1227
          %1291 = vmatpush1.bf16.msra.mxu0 %v1226
          %1292 = vmatprep.subr.bf16.mxu0 %v1229
          %1293 = vmatpush1.bf16.msra.mxu0 %v1228
          %1294 = vmatprep.subr.bf16.mxu0 %v1231
          %1295 = vmatpush1.bf16.msra.mxu0 %v1230
          %1296 = vmatprep.subr.bf16.mxu0 %v1233
          %1297 = vmatpush1.bf16.msra.mxu0 %v1232
          %1298 = vmatprep.subr.bf16.mxu0 %v1235
          %1299 = vmatpush1.bf16.msra.mxu0 %v1234
          %1300 = vmatprep.subr.bf16.mxu0 %v1237
          %1301 = vmatpush1.bf16.msra.mxu0 %v1236
          %1302 = vmatprep.subr.bf16.mxu0 %v1239
          %1303 = vmatpush1.bf16.msra.mxu0 %v1238
          %1304 = vmatprep.mubr.bf16.mxu0 %v1079
          %1305 = vmatmul.mubr.bf16.gmra.mrb[0].mxu0 %v1078
          %v1306 = vpop.f32.mrb[0].mxu0
          %v1307 = vadd.f32 0.0, %v1306
          %v1308 = vpop.f32.mrb[0].mxu0
          %v1309 = vadd.f32 0.0, %v1308
          %v1310 = vpop.f32.mrb[0].mxu0
          %v1311 = vadd.f32 0.0, %v1310
          %v1312 = vpop.f32.mrb[0].mxu0
          %v1313 = vadd.f32 0.0, %v1312
          %1314 = vdwg.mxu0
          %v1315 = vadd.f32 %v1074, %v1307
          %v1316 = vadd.f32 %v1075, %v1309
          %v1317 = vadd.f32 %v1076, %v1311
          %v1318 = vadd.f32 %v1077, %v1313
          %1319 = vst [vmem:[#allocation2] sm:$0xff] %v1315
          %1320 = vst [vmem:[#allocation2 + $0x8] sm:$0xff] %v1316
          %1321 = vst [vmem:[#allocation2 + $0x10] sm:$0xff] %v1317
          %1322 = vst [vmem:[#allocation2 + $0x18] sm:$0xff] %v1318
        $region64: #{tpu_custom_call.1} parent=39 // pred_fallthru
          _
        %p1323 = scmp.eq.s32.totalorder %s38, 7
        %p1324 = scmp.eq.s32.totalorder %s39, 1
        %p1325 = pnand %p1323, %p1324
        %p1326 = pneg %p1325
        // Predicated region
        $region65: #{tpu_custom_call.1} parent=39 // pred_check
          _
        $region66: #{tpu_custom_call.1} parent=39 // pred_check_branch
          %1328 = sbr.rel (%p1325) target = $region68
        $region67: #{tpu_custom_call.1} parent=39 // pred_region
          %v1329 = vld [vmem:[#allocation2] sm:$0xff]
          %v1330 = vld [vmem:[#allocation2 + $0x8] sm:$0xff]
          %v1331 = vld [vmem:[#allocation2 + $0x10] sm:$0xff]
          %v1332 = vld [vmem:[#allocation2 + $0x18] sm:$0xff]
          %1333 = vst [vmem:[#allocation14] sm:$0xff] %v1329
          %1334 = vst [vmem:[#allocation14 + $0x8] sm:$0xff] %v1330
          %1335 = vst [vmem:[#allocation14 + $0x10] sm:$0xff] %v1331
          %1336 = vst [vmem:[#allocation14 + $0x18] sm:$0xff] %v1332
        $region68: #{tpu_custom_call.1} parent=39 // pred_fallthru
          _
        // Predicated region
        $region69: #{tpu_custom_call.1} parent=39 // pred_check
          %p1337 = pneg %p257
        $region70: #{tpu_custom_call.1} parent=39 // pred_check_branch
          %1339 = sbr.rel (%p1337) target = $region72
        $region71: #{tpu_custom_call.1} parent=39 // pred_region
          %s1340 = smul.u32 2, %s37
          %s1342 = ssub.s32 512, 512
          %1343 = vsyncadd [#allocation8], %s1342
          %s1344 = smul.addr %s1340, 2
          %s1345 = smul.addr %s1344, 128
          %s1346 = scalar_lea.hbm %s7, %s1345
          %s1347 = sshll.u32 [#allocation14], 4
          %s1348 = int_to_ptr.vmem [resolvable:$true] %s1347
          %1353 = dma.vmem_to_hbm [thread:$0]  %s1348, 512, %s1346, [#allocation8], 256, 256, 16
        $region72: #{tpu_custom_call.1} parent=39 // pred_fallthru
          _
        // Predicated region
        $region73: #{tpu_custom_call.1} parent=39 // pred_check
          %p1354 = pneg %p257
        $region74: #{tpu_custom_call.1} parent=39 // pred_check_branch
          %1356 = sbr.rel (%p1354) target = $region76
        $region75: #{tpu_custom_call.1} parent=39 // pred_region
          %1357 = dma.done [#allocation8], 512
        $region76: #{tpu_custom_call.1} parent=39 // pred_fallthru
          _
      $region40: #{tpu_custom_call.1} parent=5 // pred_fallthru
        _
      %p1358 = scmp.le.s32.totalorder 2, %s27
      // Predicated region
      $region77: #{tpu_custom_call.1} parent=5 // pred_check
        %p1359 = pneg %p1358
      $region78: #{tpu_custom_call.1} parent=5 // pred_check_branch
        %1361 = sbr.rel (%p1359) target = $region80
      $region79: #{tpu_custom_call.1} parent=5 // pred_region
        %s1362 = ssub.s32 %s27, 2
      $region80: #{tpu_custom_call.1} parent=5 // pred_fallthru
        _
    $region6: #{tpu_custom_call.1} parent=1 // loop_footer
      %s31 = sadd.s32 1, %s27
    $region7: #{tpu_custom_call.1} parent=1 // loop_footer_branch
      %26 = sbr.rel target = $region3
    $region8: #{tpu_custom_call.1} parent=1 // loop_exit
      _
    %1363 = vsyncpa [#allocation7], 1
    %s1364 = scalar_lea.sflag [#allocation7], 1
    %1365 = vsyncpa %s1364, 1
    %1366 = vsyncpa [#allocation10], 1
    %s1367 = scalar_lea.sflag [#allocation10], 1
    %1368 = vsyncpa %s1367, 1
    %1369 = vsyncpa [#allocation13], 1
    %s1370 = scalar_lea.sflag [#allocation13], 1
    %1371 = vsyncpa %s1370, 1
    %1372 = vsyncpa [#allocation8], 1
    %s1373 = scalar_lea.sflag [#allocation8], 1
    %1374 = vsyncpa %s1373, 1

</llo_original>
